<compile_context>
chip_gen: v7x
topology: tpu7x:2x2x1
jax: 0.10.0
libtpu: 0.0.40
codegen_flags: <defaults>
</compile_context>

<pallas_src>
import functools

import jax
import jax.numpy as jnp
from jax.experimental import pallas as pl
from jax.experimental.pallas import tpu as pltpu
import math


# ------------------------------ small helpers -------------------------------

def _round_up(n, m):
    return ((n + m - 1) // m) * m


def _pick_tm(n_rows, cap=1024):
    """Row tile: large (up to `cap`) for DMA/compute overlap, but prefer >= 2
    grid steps so the 'parallel' row axis splits across both v7x TensorCores."""
    tm = min(cap, _round_up(max(n_rows, 8), 8))
    if _round_up(n_rows, tm) // tm < 2 and tm >= 16:
        tm_half = _round_up(tm // 2, 8)
        if _round_up(n_rows, tm_half) // tm_half >= 2:
            tm = tm_half
    return tm


def _vmem_limit_bytes(default=48 << 20):
    """~3/4 of physical VMEM (capped at 100 MiB); 48 MiB fallback fits v7x."""
    try:
        info = pltpu.get_tpu_info()
        cap = getattr(info, "vmem_capacity_bytes", None)
        if cap:
            return min(int(cap) * 3 // 4, 100 << 20)
    except Exception:
        pass
    return default


def _apply_act(z, act):
    if act == "sine":
        return jnp.sin(30.0 * z)
    if act == "abs":
        return jnp.abs(z)
    if act == "relu":
        return jnp.maximum(z, 0.0)
    if act == "tanh":
        return jnp.tanh(z)
    if act == "softplus":            # nn.Softplus(beta=100), numerically stable
        y = 100.0 * z
        return (jnp.maximum(y, 0.0) + jnp.log(1.0 + jnp.exp(-jnp.abs(y)))) * 0.01
    return z                          # identity


def _weight_bytes(layer):
    return (layer["w12"].size * layer["w12"].dtype.itemsize
            + layer["w3"].size * layer["w3"].dtype.itemsize
            + layer["b12"].size * 4 + layer["b3"].size * 4)


def _chunk_layers(layers, budget_bytes=12 << 20):
    """Greedily group layers so each chunk's packed weights fit the VMEM weight
    budget (x2 for pipeline buffering still leaves room for activation tiles)."""
    chunks, cur, cur_bytes = [], [], 0
    for layer in layers:
        wb = _weight_bytes(layer)
        if cur and cur_bytes + wb > budget_bytes:
            chunks.append(cur)
            cur, cur_bytes = [], 0
        cur.append(layer)
        cur_bytes += wb
    if cur:
        chunks.append(cur)
    # TODO(synk): if a SINGLE layer ever exceeds the budget (d_hidden >~ 2048),
    # add column tiling of that layer's weights; not needed for this module.
    return chunks


# ------------------------------ Pallas kernel --------------------------------

def _fused_kernel(*refs, n_layers, acts):
    """One row tile through `n_layers` QuadraticLayers, all weights in VMEM.

    refs = (x_ref, [w12, w3, b12, b3] * n_layers, o_ref)
    Per layer:  z = (x@W1+b1)*(x@W2+b2) + (x^2@W3+b3)  via two MXU dots
    ([W1|W2] packed lane-dense, f32 accumulation), activation fused.
    """
    x_ref = refs[0]
    o_ref = refs[-1]

    h = x_ref[...]                                   # [tm, d_in_p] f32
    for l in range(n_layers):
        w12_ref = refs[1 + 4 * l]
        w3_ref = refs[2 + 4 * l]
        b12_ref = refs[3 + 4 * l]
        b3_ref = refs[4 + 4 * l]
        cdt = w12_ref.dtype                          # compute dtype (bf16)
        hc = h.astype(cdt)
        hsq = (h * h).astype(cdt)                    # square in f32, cast once
        y12 = jnp.dot(hc, w12_ref[...], preferred_element_type=jnp.float32)
        y12 = y12 + b12_ref[...]
        y3 = jnp.dot(hsq, w3_ref[...], preferred_element_type=jnp.float32)
        y3 = y3 + b3_ref[...]
        dp = w3_ref.shape[-1]                        # d_out_p, multiple of 128
        z = y12[:, :dp] * y12[:, dp:] + y3           # vreg-aligned split
        # Padded columns stay harmless: even when act(0) != 0 (softplus),
        # the next layer's padded weight ROWS are zero, so they never leak.
        h = _apply_act(z, acts[l])

    o_ref[...] = h.astype(o_ref.dtype)


def _fused_call(x, chunk, acts, *, tm):
    """x: [B_p, d_in_p] f32 (row/lane padded). Returns [B_p, d_out_p_last] f32."""
    B, d0p = x.shape
    assert B % tm == 0 and d0p == chunk[0]["d_in_p"]
    d_last_p = chunk[-1]["d_out_p"]
    n_layers = len(chunk)

    in_specs = [pl.BlockSpec((tm, d0p), lambda i: (i, 0))]
    args = [x]
    for layer in chunk:
        for name in ("w12", "w3", "b12", "b3"):
            a = layer[name]
            # Full-array block with a constant index_map: fetched once, then
            # resident in VMEM for the whole row-tile grid.
            in_specs.append(pl.BlockSpec(a.shape, lambda i, nd=a.ndim: (0,) * nd))
            args.append(a)

    flops, transc, bytes_acc = 0, 0, x.size * 4 + B * d_last_p * 4
    for layer, act in zip(chunk, acts):
        flops += 6 * B * layer["d_in_p"] * layer["d_out_p"]
        if act in ("sine", "tanh", "softplus"):
            transc += B * layer["d_out_p"]
        bytes_acc += _weight_bytes(layer)
    cost = pl.CostEstimate(flops=flops, transcendentals=transc,
                           bytes_accessed=bytes_acc)

    out = pl.pallas_call(
        functools.partial(_fused_kernel, n_layers=n_layers, acts=tuple(acts)),
        out_shape=jax.ShapeDtypeStruct((B, d_last_p), jnp.float32),
        grid_spec=pltpu.PrefetchScalarGridSpec(
            num_scalar_prefetch=0,
            grid=(B // tm,),
            in_specs=in_specs,
            out_specs=pl.BlockSpec((tm, d_last_p), lambda i: (i, 0)),
        ),
        compiler_params=pltpu.CompilerParams(
            dimension_semantics=("parallel",),
            vmem_limit_bytes=_vmem_limit_bytes(),
        ),
        cost_estimate=cost,
    )(*args)
    return out


# --------------------------- init & weight packing ---------------------------

def _init_quadratic_layer(key, d_in, d_out, *, first_layer):
    """JAX port of sine_init / first_layer_sine_init. W stored [d_in, d_out]."""
    k1w, k1b, k2w, k3w = jax.random.split(key, 4)
    bound1 = (1.0 / d_in) if first_layer else (math.sqrt(6.0 / d_in) / 30.0)
    w1 = jax.random.uniform(k1w, (d_in, d_out), jnp.float32, -bound1, bound1)
    bb = 1.0 / math.sqrt(d_in)        # nn.Linear default bias init (untouched)
    b1 = jax.random.uniform(k1b, (d_out,), jnp.float32, -bb, bb)
    w2 = 1e-16 * jax.random.normal(k2w, (d_in, d_out), jnp.float32)
    b2 = jnp.ones((d_out,), jnp.float32)
    w3 = 1e-16 * jax.random.normal(k3w, (d_in, d_out), jnp.float32)
    b3 = jnp.zeros((d_out,), jnp.float32)
    return w1, b1, w2, b2, w3, b3


def _pack_layer(w1, b1, w2, b2, w3, b3, *, d_in_p, compute_dtype):
    """Zero-pad to (d_in_p, d_out_p) with d_out_p % 128 == 0, pack [W1|W2]."""
    d_in, d_out = w1.shape
    d_out_p = _round_up(d_out, 128)

    def pad_w(w):
        return jnp.zeros((d_in_p, d_out_p), jnp.float32).at[:d_in, :d_out].set(w)

    def pad_b(b):
        return jnp.zeros((d_out_p,), jnp.float32).at[:d_out].set(b)

    w1p, w2p, w3p = pad_w(w1), pad_w(w2), pad_w(w3)
    b1p, b2p, b3p = pad_b(b1), pad_b(b2), pad_b(b3)

    return {
        "w12": jnp.concatenate([w1p, w2p], axis=-1).astype(compute_dtype),
        "w3": w3p.astype(compute_dtype),
        "b12": jnp.concatenate([b1p, b2p])[None, :],     # [1, 2*d_out_p] f32
        "b3": b3p[None, :],                              # [1, d_out_p]   f32
        # f32 padded copies kept for the pure-JAX reference check
        "ref": (w1p, b1p, w2p, b2p, w3p, b3p),
        "d_in": d_in, "d_out": d_out, "d_in_p": d_in_p, "d_out_p": d_out_p,
    }


def init_network(key, *, in_features=3, d_hidden=256, n_layers=8, d_out=1,
                 compute_dtype=jnp.bfloat16):
    """GeodesyNetsQ parameters: n_layers + 1 QuadraticLayers."""
    dims = [in_features] + [d_hidden] * n_layers + [d_out]
    keys = jax.random.split(key, len(dims) - 1)
    layers = []
    d_in_p = _round_up(in_features, 128)     # lane-dense network input
    for l in range(len(dims) - 1):
        params = _init_quadratic_layer(keys[l], dims[l], dims[l + 1],
                                       first_layer=(l == 0))
        layer = _pack_layer(*params, d_in_p=d_in_p, compute_dtype=compute_dtype)
        layers.append(layer)
        d_in_p = layer["d_out_p"]            # activations stay lane-padded
    return layers


# ------------------------------ forward passes -------------------------------

def network_forward(points, layers, *, nl="sine"):
    """Pallas version of Network.forward (single fused kernel when weights fit)."""
    batch = points.shape[0]
    x = points.reshape(-1, points.shape[-1]).astype(jnp.float32)
    n_rows, d_in = x.shape
    tm = _pick_tm(n_rows)
    n_rows_p = _round_up(n_rows, tm)

    d0p = layers[0]["d_in_p"]
    h = jnp.zeros((n_rows_p, d0p), jnp.float32).at[:n_rows, :d_in].set(x)

    acts = [nl] * (len(layers) - 1) + ["abs"]
    idx = 0
    for chunk in _chunk_layers(layers):      # one chunk for the default config
        h = _fused_call(h, chunk, acts[idx: idx + len(chunk)], tm=tm)
        idx += len(chunk)

    out = h[:n_rows, :layers[-1]["d_out"]]
    return out.reshape(batch, -1)


def network_forward_ref(points, layers, *, nl="sine", compute_dtype=jnp.bfloat16):
    """Pure-JAX reference with the same padded / bf16-operand numerics
    (the bf16 weight path is an intentional, documented precision choice)."""
    batch = points.shape[0]
    x = points.reshape(-1, points.shape[-1]).astype(jnp.float32)
    n_rows, d_in = x.shape
    h = jnp.zeros((_round_up(max(n_rows, 8), 8), layers[0]["d_in_p"]),
                  jnp.float32).at[:n_rows, :d_in].set(x)

    last = len(layers) - 1
    for l, layer in enumerate(layers):
        act = "abs" if l == last else nl
        w1p, b1p, w2p, b2p, w3p, b3p = layer["ref"]
        xc = h.astype(compute_dtype)
        xsq = (h * h).astype(compute_dtype)
        y1 = jnp.dot(xc, w1p.astype(compute_dtype),
                     preferred_element_type=jnp.float32) + b1p
        y2 = jnp.dot(xc, w2p.astype(compute_dtype),
                     preferred_element_type=jnp.float32) + b2p
        y3 = jnp.dot(xsq, w3p.astype(compute_dtype),
                     preferred_element_type=jnp.float32) + b3p
        h = _apply_act(y1 * y2 + y3, act)

    out = h[:n_rows, :layers[-1]["d_out"]]
    return out.reshape(batch, -1)


# ----------------------------------- demo ------------------------------------

if __name__ == "__main__":
    # Small but structurally faithful config:
    #   points [batch=2, n_pts=16, in_features=3]
    #   GeodesyNetsQ with 3 QuadraticLayers (3 -> 64 -> 64 -> 1), nl='sine'.
    in_features, d_hidden, n_hidden = 3, 64, 2
    batch, n_pts = 2, 16

    root = jax.random.PRNGKey(0)
    k_params, k_pts = jax.random.split(root)

    layers = init_network(k_params, in_features=in_features, d_hidden=d_hidden,
                          n_layers=n_hidden, d_out=1)
    points = jax.random.normal(k_pts, (batch, n_pts, in_features), jnp.float32)

    rho = network_forward(points, layers, nl="sine")
    jax.block_until_ready(rho)

    rho_ref = network_forward_ref(points, layers, nl="sine")
    assert rho.shape == (batch, n_pts), rho.shape
    max_err = float(jnp.max(jnp.abs(rho - rho_ref)))
    assert jnp.allclose(rho, rho_ref, atol=1e-2, rtol=1e-2), f"max err {max_err}"

    print("KERNEL_OK")
</pallas_src>

<mosaic_0001>
module attributes {stable_mosaic.version = 11 : i64} {
  func.func @_fused_kernel(%arg0: i32, %arg1: memref<16x128xf32, #tpu.memory_space<vmem>>, %arg2: memref<128x256xbf16, #tpu.memory_space<vmem>>, %arg3: memref<128x128xbf16, #tpu.memory_space<vmem>>, %arg4: memref<1x256xf32, #tpu.memory_space<vmem>>, %arg5: memref<1x128xf32, #tpu.memory_space<vmem>>, %arg6: memref<128x256xbf16, #tpu.memory_space<vmem>>, %arg7: memref<128x128xbf16, #tpu.memory_space<vmem>>, %arg8: memref<1x256xf32, #tpu.memory_space<vmem>>, %arg9: memref<1x128xf32, #tpu.memory_space<vmem>>, %arg10: memref<128x256xbf16, #tpu.memory_space<vmem>>, %arg11: memref<128x128xbf16, #tpu.memory_space<vmem>>, %arg12: memref<1x256xf32, #tpu.memory_space<vmem>>, %arg13: memref<1x128xf32, #tpu.memory_space<vmem>>, %arg14: memref<16x128xf32, #tpu.memory_space<vmem>>) attributes {dimension_semantics = [#tpu.dimension_semantics<parallel>], iteration_bounds = array<i64: 2>, scalar_prefetch = 0 : i64, scratch_operands = 0 : i64, tpu.core_type = #tpu.core_type<tc>, window_params = [{transform_indices = @transform_0, window_bounds = array<i64: 16, 128>}, {pipeline_mode = #tpu.pipeline_mode<synchronous>, transform_indices = @transform_1, window_bounds = array<i64: 128, 256>}, {pipeline_mode = #tpu.pipeline_mode<synchronous>, transform_indices = @transform_2, window_bounds = array<i64: 128, 128>}, {pipeline_mode = #tpu.pipeline_mode<synchronous>, transform_indices = @transform_3, window_bounds = array<i64: 1, 256>}, {pipeline_mode = #tpu.pipeline_mode<synchronous>, transform_indices = @transform_4, window_bounds = array<i64: 1, 128>}, {pipeline_mode = #tpu.pipeline_mode<synchronous>, transform_indices = @transform_5, window_bounds = array<i64: 128, 256>}, {pipeline_mode = #tpu.pipeline_mode<synchronous>, transform_indices = @transform_6, window_bounds = array<i64: 128, 128>}, {pipeline_mode = #tpu.pipeline_mode<synchronous>, transform_indices = @transform_7, window_bounds = array<i64: 1, 256>}, {pipeline_mode = #tpu.pipeline_mode<synchronous>, transform_indices = @transform_8, window_bounds = array<i64: 1, 128>}, {pipeline_mode = #tpu.pipeline_mode<synchronous>, transform_indices = @transform_9, window_bounds = array<i64: 128, 256>}, {pipeline_mode = #tpu.pipeline_mode<synchronous>, transform_indices = @transform_10, window_bounds = array<i64: 128, 128>}, {pipeline_mode = #tpu.pipeline_mode<synchronous>, transform_indices = @transform_11, window_bounds = array<i64: 1, 256>}, {pipeline_mode = #tpu.pipeline_mode<synchronous>, transform_indices = @transform_12, window_bounds = array<i64: 1, 128>}, {transform_indices = @transform_13, window_bounds = array<i64: 16, 128>}]} {
    %c0 = arith.constant 0 : index
    %c0_0 = arith.constant 0 : index
    %0 = vector.load %arg1[%c0, %c0_0] : memref<16x128xf32, #tpu.memory_space<vmem>>, vector<16x128xf32>
    %1 = arith.truncf %0 : vector<16x128xf32> to vector<16x128xbf16>
    %2 = arith.mulf %0, %0 : vector<16x128xf32>
    %3 = arith.truncf %2 : vector<16x128xf32> to vector<16x128xbf16>
    %c0_1 = arith.constant 0 : index
    %c0_2 = arith.constant 0 : index
    %4 = vector.load %arg2[%c0_1, %c0_2] : memref<128x256xbf16, #tpu.memory_space<vmem>>, vector<128x256xbf16>
    %cst = arith.constant dense<0.000000e+00> : vector<16x256xf32>
    %5 = tpu.matmul %1, %4, %cst {dimension_numbers = #tpu.dot_dimension_numbers<[1], [0], [0], [1], [0, 0, 1, 1], [], []>} : vector<16x128xbf16>, vector<128x256xbf16>, vector<16x256xf32> -> vector<16x256xf32>
    %c0_3 = arith.constant 0 : index
    %c0_4 = arith.constant 0 : index
    %6 = vector.load %arg4[%c0_3, %c0_4] : memref<1x256xf32, #tpu.memory_space<vmem>>, vector<1x256xf32>
    %7 = vector.broadcast %6 : vector<1x256xf32> to vector<16x256xf32>
    %8 = arith.addf %5, %7 : vector<16x256xf32>
    %c0_5 = arith.constant 0 : index
    %c0_6 = arith.constant 0 : index
    %9 = vector.load %arg3[%c0_5, %c0_6] : memref<128x128xbf16, #tpu.memory_space<vmem>>, vector<128x128xbf16>
    %cst_7 = arith.constant dense<0.000000e+00> : vector<16x128xf32>
    %10 = tpu.matmul %3, %9, %cst_7 {dimension_numbers = #tpu.dot_dimension_numbers<[1], [0], [0], [1], [0, 0, 1, 1], [], []>} : vector<16x128xbf16>, vector<128x128xbf16>, vector<16x128xf32> -> vector<16x128xf32>
    %c0_8 = arith.constant 0 : index
    %c0_9 = arith.constant 0 : index
    %11 = vector.load %arg5[%c0_8, %c0_9] : memref<1x128xf32, #tpu.memory_space<vmem>>, vector<1x128xf32>
    %12 = vector.broadcast %11 : vector<1x128xf32> to vector<16x128xf32>
    %13 = arith.addf %10, %12 : vector<16x128xf32>
    %14 = vector.extract_strided_slice %8 {offsets = [0, 0], sizes = [16, 128], strides = [1, 1]} : vector<16x256xf32> to vector<16x128xf32>
    %15 = vector.extract_strided_slice %8 {offsets = [0, 128], sizes = [16, 128], strides = [1, 1]} : vector<16x256xf32> to vector<16x128xf32>
    %16 = arith.mulf %14, %15 : vector<16x128xf32>
    %17 = arith.addf %16, %13 : vector<16x128xf32>
    %cst_10 = arith.constant 3.000000e+01 : f32
    %18 = vector.broadcast %cst_10 : f32 to vector<16x128xf32>
    %19 = arith.mulf %18, %17 : vector<16x128xf32>
    %20 = math.sin %19 : vector<16x128xf32>
    %21 = arith.truncf %20 : vector<16x128xf32> to vector<16x128xbf16>
    %22 = arith.mulf %20, %20 : vector<16x128xf32>
    %23 = arith.truncf %22 : vector<16x128xf32> to vector<16x128xbf16>
    %c0_11 = arith.constant 0 : index
    %c0_12 = arith.constant 0 : index
    %24 = vector.load %arg6[%c0_11, %c0_12] : memref<128x256xbf16, #tpu.memory_space<vmem>>, vector<128x256xbf16>
    %cst_13 = arith.constant dense<0.000000e+00> : vector<16x256xf32>
    %25 = tpu.matmul %21, %24, %cst_13 {dimension_numbers = #tpu.dot_dimension_numbers<[1], [0], [0], [1], [0, 0, 1, 1], [], []>} : vector<16x128xbf16>, vector<128x256xbf16>, vector<16x256xf32> -> vector<16x256xf32>
    %c0_14 = arith.constant 0 : index
    %c0_15 = arith.constant 0 : index
    %26 = vector.load %arg8[%c0_14, %c0_15] : memref<1x256xf32, #tpu.memory_space<vmem>>, vector<1x256xf32>
    %27 = vector.broadcast %26 : vector<1x256xf32> to vector<16x256xf32>
    %28 = arith.addf %25, %27 : vector<16x256xf32>
    %c0_16 = arith.constant 0 : index
    %c0_17 = arith.constant 0 : index
    %29 = vector.load %arg7[%c0_16, %c0_17] : memref<128x128xbf16, #tpu.memory_space<vmem>>, vector<128x128xbf16>
    %cst_18 = arith.constant dense<0.000000e+00> : vector<16x128xf32>
    %30 = tpu.matmul %23, %29, %cst_18 {dimension_numbers = #tpu.dot_dimension_numbers<[1], [0], [0], [1], [0, 0, 1, 1], [], []>} : vector<16x128xbf16>, vector<128x128xbf16>, vector<16x128xf32> -> vector<16x128xf32>
    %c0_19 = arith.constant 0 : index
    %c0_20 = arith.constant 0 : index
    %31 = vector.load %arg9[%c0_19, %c0_20] : memref<1x128xf32, #tpu.memory_space<vmem>>, vector<1x128xf32>
    %32 = vector.broadcast %31 : vector<1x128xf32> to vector<16x128xf32>
    %33 = arith.addf %30, %32 : vector<16x128xf32>
    %34 = vector.extract_strided_slice %28 {offsets = [0, 0], sizes = [16, 128], strides = [1, 1]} : vector<16x256xf32> to vector<16x128xf32>
    %35 = vector.extract_strided_slice %28 {offsets = [0, 128], sizes = [16, 128], strides = [1, 1]} : vector<16x256xf32> to vector<16x128xf32>
    %36 = arith.mulf %34, %35 : vector<16x128xf32>
    %37 = arith.addf %36, %33 : vector<16x128xf32>
    %cst_21 = arith.constant 3.000000e+01 : f32
    %38 = vector.broadcast %cst_21 : f32 to vector<16x128xf32>
    %39 = arith.mulf %38, %37 : vector<16x128xf32>
    %40 = math.sin %39 : vector<16x128xf32>
    %41 = arith.truncf %40 : vector<16x128xf32> to vector<16x128xbf16>
    %42 = arith.mulf %40, %40 : vector<16x128xf32>
    %43 = arith.truncf %42 : vector<16x128xf32> to vector<16x128xbf16>
    %c0_22 = arith.constant 0 : index
    %c0_23 = arith.constant 0 : index
    %44 = vector.load %arg10[%c0_22, %c0_23] : memref<128x256xbf16, #tpu.memory_space<vmem>>, vector<128x256xbf16>
    %cst_24 = arith.constant dense<0.000000e+00> : vector<16x256xf32>
    %45 = tpu.matmul %41, %44, %cst_24 {dimension_numbers = #tpu.dot_dimension_numbers<[1], [0], [0], [1], [0, 0, 1, 1], [], []>} : vector<16x128xbf16>, vector<128x256xbf16>, vector<16x256xf32> -> vector<16x256xf32>
    %c0_25 = arith.constant 0 : index
    %c0_26 = arith.constant 0 : index
    %46 = vector.load %arg12[%c0_25, %c0_26] : memref<1x256xf32, #tpu.memory_space<vmem>>, vector<1x256xf32>
    %47 = vector.broadcast %46 : vector<1x256xf32> to vector<16x256xf32>
    %48 = arith.addf %45, %47 : vector<16x256xf32>
    %c0_27 = arith.constant 0 : index
    %c0_28 = arith.constant 0 : index
    %49 = vector.load %arg11[%c0_27, %c0_28] : memref<128x128xbf16, #tpu.memory_space<vmem>>, vector<128x128xbf16>
    %cst_29 = arith.constant dense<0.000000e+00> : vector<16x128xf32>
    %50 = tpu.matmul %43, %49, %cst_29 {dimension_numbers = #tpu.dot_dimension_numbers<[1], [0], [0], [1], [0, 0, 1, 1], [], []>} : vector<16x128xbf16>, vector<128x128xbf16>, vector<16x128xf32> -> vector<16x128xf32>
    %c0_30 = arith.constant 0 : index
    %c0_31 = arith.constant 0 : index
    %51 = vector.load %arg13[%c0_30, %c0_31] : memref<1x128xf32, #tpu.memory_space<vmem>>, vector<1x128xf32>
    %52 = vector.broadcast %51 : vector<1x128xf32> to vector<16x128xf32>
    %53 = arith.addf %50, %52 : vector<16x128xf32>
    %54 = vector.extract_strided_slice %48 {offsets = [0, 0], sizes = [16, 128], strides = [1, 1]} : vector<16x256xf32> to vector<16x128xf32>
    %55 = vector.extract_strided_slice %48 {offsets = [0, 128], sizes = [16, 128], strides = [1, 1]} : vector<16x256xf32> to vector<16x128xf32>
    %56 = arith.mulf %54, %55 : vector<16x128xf32>
    %57 = arith.addf %56, %53 : vector<16x128xf32>
    %58 = math.absf %57 : vector<16x128xf32>
    %c0_32 = arith.constant 0 : index
    %c0_33 = arith.constant 0 : index
    %59 = vector.load %arg14[%c0_32, %c0_33] : memref<16x128xf32, #tpu.memory_space<vmem>>, vector<16x128xf32>
    tpu.vector_store %arg14[%c0_32, %c0_33], %58 {strides = array<i32>} : memref<16x128xf32, #tpu.memory_space<vmem>>, vector<16x128xf32>,
    return
  }
  func.func @transform_0(%arg0: i32) -> (i32, i32) {
    %c0_i32 = arith.constant 0 : i32
    %c0_i32_0 = arith.constant 0 : i32
    return %arg0, %c0_i32 : i32, i32
  }
  func.func @transform_1(%arg0: i32) -> (i32, i32) {
    %c0_i32 = arith.constant 0 : i32
    %c0_i32_0 = arith.constant 0 : i32
    %c0_i32_1 = arith.constant 0 : i32
    return %c0_i32, %c0_i32_0 : i32, i32
  }
  func.func @transform_2(%arg0: i32) -> (i32, i32) {
    %c0_i32 = arith.constant 0 : i32
    %c0_i32_0 = arith.constant 0 : i32
    %c0_i32_1 = arith.constant 0 : i32
    return %c0_i32, %c0_i32_0 : i32, i32
  }
  func.func @transform_3(%arg0: i32) -> (i32, i32) {
    %c0_i32 = arith.constant 0 : i32
    %c0_i32_0 = arith.constant 0 : i32
    %c0_i32_1 = arith.constant 0 : i32
    return %c0_i32, %c0_i32_0 : i32, i32
  }
  func.func @transform_4(%arg0: i32) -> (i32, i32) {
    %c0_i32 = arith.constant 0 : i32
    %c0_i32_0 = arith.constant 0 : i32
    %c0_i32_1 = arith.constant 0 : i32
    return %c0_i32, %c0_i32_0 : i32, i32
  }
  func.func @transform_5(%arg0: i32) -> (i32, i32) {
    %c0_i32 = arith.constant 0 : i32
    %c0_i32_0 = arith.constant 0 : i32
    %c0_i32_1 = arith.constant 0 : i32
    return %c0_i32, %c0_i32_0 : i32, i32
  }
  func.func @transform_6(%arg0: i32) -> (i32, i32) {
    %c0_i32 = arith.constant 0 : i32
    %c0_i32_0 = arith.constant 0 : i32
    %c0_i32_1 = arith.constant 0 : i32
    return %c0_i32, %c0_i32_0 : i32, i32
  }
  func.func @transform_7(%arg0: i32) -> (i32, i32) {
    %c0_i32 = arith.constant 0 : i32
    %c0_i32_0 = arith.constant 0 : i32
    %c0_i32_1 = arith.constant 0 : i32
    return %c0_i32, %c0_i32_0 : i32, i32
  }
  func.func @transform_8(%arg0: i32) -> (i32, i32) {
    %c0_i32 = arith.constant 0 : i32
    %c0_i32_0 = arith.constant 0 : i32
    %c0_i32_1 = arith.constant 0 : i32
    return %c0_i32, %c0_i32_0 : i32, i32
  }
  func.func @transform_9(%arg0: i32) -> (i32, i32) {
    %c0_i32 = arith.constant 0 : i32
    %c0_i32_0 = arith.constant 0 : i32
    %c0_i32_1 = arith.constant 0 : i32
    return %c0_i32, %c0_i32_0 : i32, i32
  }
  func.func @transform_10(%arg0: i32) -> (i32, i32) {
    %c0_i32 = arith.constant 0 : i32
    %c0_i32_0 = arith.constant 0 : i32
    %c0_i32_1 = arith.constant 0 : i32
    return %c0_i32, %c0_i32_0 : i32, i32
  }
  func.func @transform_11(%arg0: i32) -> (i32, i32) {
    %c0_i32 = arith.constant 0 : i32
    %c0_i32_0 = arith.constant 0 : i32
    %c0_i32_1 = arith.constant 0 : i32
    return %c0_i32, %c0_i32_0 : i32, i32
  }
  func.func @transform_12(%arg0: i32) -> (i32, i32) {
    %c0_i32 = arith.constant 0 : i32
    %c0_i32_0 = arith.constant 0 : i32
    %c0_i32_1 = arith.constant 0 : i32
    return %c0_i32, %c0_i32_0 : i32, i32
  }
  func.func @transform_13(%arg0: i32) -> (i32, i32) {
    %c0_i32 = arith.constant 0 : i32
    %c0_i32_0 = arith.constant 0 : i32
    return %arg0, %c0_i32 : i32, i32
  }
}

</mosaic_0001>

<llo_original>
// kernel: tpu_custom_call.1
$region0: #{tpu_custom_call.1}
  #allocation0 [shape = 'u32[]', space=smem, size = 0x4, offset = 0x4, fixed_abs, tag = 'smem constant byte address 0x4 - core index']
  #allocation1 [shape = 'u32[144,128]{1,0:T(1,128)}', space=vmem, size = 0x12000, scoped, tag = 'internal scratch']
  %s0 = inlined_call_operand.hbm [shape: f32[32,128], index: 0, kind: input, shape index: {}]
  %s1 = inlined_call_operand.hbm [shape: bf16[128,256], index: 1, kind: input, shape index: {}]
  %s2 = inlined_call_operand.hbm [shape: bf16[128,128], index: 2, kind: input, shape index: {}]
  %s3 = inlined_call_operand.vmem [shape: f32[1,256], index: 3, kind: input, shape index: {}]
  %s4 = inlined_call_operand.vmem [shape: f32[1,128], index: 4, kind: input, shape index: {}]
  %s5 = inlined_call_operand.hbm [shape: bf16[128,256], index: 5, kind: input, shape index: {}]
  %s6 = inlined_call_operand.hbm [shape: bf16[128,128], index: 6, kind: input, shape index: {}]
  %s7 = inlined_call_operand.vmem [shape: f32[1,256], index: 7, kind: input, shape index: {}]
  %s8 = inlined_call_operand.vmem [shape: f32[1,128], index: 8, kind: input, shape index: {}]
  %s9 = inlined_call_operand.hbm [shape: bf16[128,256], index: 9, kind: input, shape index: {}]
  %s10 = inlined_call_operand.hbm [shape: bf16[128,128], index: 10, kind: input, shape index: {}]
  %s11 = inlined_call_operand.vmem [shape: f32[1,256], index: 11, kind: input, shape index: {}]
  %s12 = inlined_call_operand.vmem [shape: f32[1,128], index: 12, kind: input, shape index: {}]
  %s13 = inlined_call_operand.hbm [shape: f32[32,128], index: 13, kind: output, shape index: {}]
  %s14 = sld [smem:[#allocation0]]
  $region113: #{tpu_custom_call.1} parent=0
    _
  %s16 = ssub.s32 1, %s14
  %s17 = scalar_select 0, %s16, %s14
  $region1: #{tpu_custom_call.1} parent=0
    #allocation2 [shape = 'u8[16384]{0}', space=vmem, size = 0x4000, scoped, tag = 'input window, operand 0']
    #allocation3 [shape = 's32[2]{0}', space=sflag, size = 0x8, scoped, tag = 'scoped memory for tpu_custom_call.1']
    #allocation4 [shape = 's32[2]{0}', space=sflag, size = 0x8, scoped, tag = 'scoped memory for tpu_custom_call.1']
    #allocation5 [shape = 'u8[65536]{0}', space=vmem, size = 0x10000, scoped, tag = 'input window, operand 1, single buffered']
    #allocation6 [shape = 's32[1]{0}', space=sflag, size = 0x4, scoped, tag = 'scoped memory for tpu_custom_call.1']
    #allocation7 [shape = 'u8[32768]{0}', space=vmem, size = 0x8000, scoped, tag = 'input window, operand 2, single buffered']
    #allocation8 [shape = 'u8[65536]{0}', space=vmem, size = 0x10000, scoped, tag = 'input window, operand 5, single buffered']
    #allocation9 [shape = 's32[1]{0}', space=sflag, size = 0x4, scoped, tag = 'scoped memory for tpu_custom_call.1']
    #allocation10 [shape = 'u8[32768]{0}', space=vmem, size = 0x8000, scoped, tag = 'input window, operand 6, single buffered']
    #allocation11 [shape = 'u8[65536]{0}', space=vmem, size = 0x10000, scoped, tag = 'input window, operand 9, single buffered']
    #allocation12 [shape = 's32[1]{0}', space=sflag, size = 0x4, scoped, tag = 'scoped memory for tpu_custom_call.1']
    #allocation13 [shape = 'u8[32768]{0}', space=vmem, size = 0x8000, scoped, tag = 'input window, operand 10, single buffered']
    #allocation14 [shape = 'u8[16384]{0}', space=vmem, size = 0x4000, scoped, tag = 'output window, operand 0']
    %18 = vsyncpa [#allocation3], 0
    %s19 = scalar_lea.sflag [#allocation3], 1
    %20 = vsyncpa %s19, 0
    %21 = vsyncpa [#allocation6], 0
    %22 = vsyncpa [#allocation9], 0
    %23 = vsyncpa [#allocation12], 0
    %24 = vsyncpa [#allocation4], 0
    %s25 = scalar_lea.sflag [#allocation4], 1
    %26 = vsyncpa %s25, 0
    loop: start=0, step=1, limit=4
    $region2: #{tpu_custom_call.1} parent=1 // loop_pre_header
      _
    $region3: #{tpu_custom_call.1} parent=1 // loop_header
      %s28 = sphi 0, %s32
      %p29 = scmp.ge.s32.totalorder %s28, 4
      %s38 = sphi 0, %s40
      %s41 = sphi 0, %s38
      %s42 = sphi 0, %s41
      %s58 = sphi 0, %s42
      %s62 = sphi 0, %s62
      %s64 = sphi 0, %s62
      %s65 = sphi 0, %s64
      %s79 = sphi 0, %s65
      %s83 = sphi 0, %s83
      %s85 = sphi 0, %s83
      %s86 = sphi 0, %s85
      %s100 = sphi 0, %s86
      %s104 = sphi 0, %s104
      %s106 = sphi 0, %s104
      %s107 = sphi 0, %s106
      %s121 = sphi 0, %s107
      %s125 = sphi 0, %s125
      %s127 = sphi 0, %s125
      %s128 = sphi 0, %s127
      %s142 = sphi 0, %s128
      %s146 = sphi 0, %s146
      %s148 = sphi 0, %s146
      %s149 = sphi 0, %s148
      %s163 = sphi 0, %s149
      %s167 = sphi 0, %s167
      %s169 = sphi 0, %s167
      %s170 = sphi 0, %s169
      %s184 = sphi 0, %s170
      %s188 = sphi 0, %s188
      %s190 = sphi 0, %s188
      %s191 = sphi 0, %s190
      %s205 = sphi 0, %s191
      %s209 = sphi 0, %s209
      %s211 = sphi 0, %s209
      %s212 = sphi 0, %s211
      %s226 = sphi 0, %s212
      %s230 = sphi 0, %s230
      %s232 = sphi 0, %s230
      %s233 = sphi 0, %s232
      %s247 = sphi 0, %s233
      %s251 = sphi 0, %s251
      %s253 = sphi 0, %s251
      %s254 = sphi 0, %s253
      %s268 = sphi 0, %s254
      %s272 = sphi 0, %s272
      %s274 = sphi 0, %s272
      %s275 = sphi 0, %s274
      %s289 = sphi 0, %s275
      %s293 = sphi 0, %s293
      %s295 = sphi 0, %s293
      %s296 = sphi 0, %s295
      %s310 = sphi 0, %s296
      %s316 = sphi 0, %s318
      %s319 = sphi 0, %s316
      %s320 = sphi 0, %s319
      %s336 = sphi 0, %s320
    $region4: #{tpu_custom_call.1} parent=1 // loop_header_branch
      %31 = sbr.rel (%p29) target = $region8
    $region5: #{tpu_custom_call.1} parent=1 // loop_body
      %s33 = ssub.s32 %s28, 1
      %s34 = ssub.s32 %s28, 2
      %s35 = sadd.s32 %s28, 1
      %s36 = ssub.s32 %s28, %s35
      %p37 = scmp.eq.s32.totalorder %s36, 0
      %s39 = sadd.s32 %s38, 1
      %s40 = scalar_select %p37, %s38, %s39
      %p43 = pneg %p37
      %p44 = scmp.eq.s32.totalorder %s28, 1
      %p45 = por %p43, %p44
      %p46 = scmp.ne.s32.totalorder %s38, %s41
      %p47 = scmp.eq.s32.totalorder %s28, 0
      %p48 = por %p46, %p47
      %p49 = scmp.ne.s32.totalorder %s38, %s41
      %p50 = scmp.eq.s32.totalorder %s33, 1
      %p51 = por %p49, %p50
      %p52 = scmp.ne.s32.totalorder %s41, %s42
      %p53 = scmp.eq.s32.totalorder %s33, 0
      %p54 = por %p52, %p53
      %p55 = scmp.ne.s32.totalorder %s41, %s42
      %p56 = scmp.eq.s32.totalorder %s34, 1
      %p57 = por %p55, %p56
      %p59 = scmp.ne.s32.totalorder %s42, %s58
      %p60 = scmp.eq.s32.totalorder %s34, 0
      %p61 = por %p59, %p60
      %s63 = sadd.s32 %s62, 1
      %p66 = scmp.eq.s32.totalorder %s28, 1
      %p67 = scmp.ne.s32.totalorder %s62, %s64
      %p68 = scmp.eq.s32.totalorder %s28, 0
      %p69 = por %p67, %p68
      %p70 = scmp.ne.s32.totalorder %s62, %s64
      %p71 = scmp.eq.s32.totalorder %s33, 1
      %p72 = por %p70, %p71
      %p73 = scmp.ne.s32.totalorder %s64, %s65
      %p74 = scmp.eq.s32.totalorder %s33, 0
      %p75 = por %p73, %p74
      %p76 = scmp.ne.s32.totalorder %s64, %s65
      %p77 = scmp.eq.s32.totalorder %s34, 1
      %p78 = por %p76, %p77
      %p80 = scmp.ne.s32.totalorder %s65, %s79
      %p81 = scmp.eq.s32.totalorder %s34, 0
      %p82 = por %p80, %p81
      %s84 = sadd.s32 %s83, 1
      %p87 = scmp.eq.s32.totalorder %s28, 1
      %p88 = scmp.ne.s32.totalorder %s83, %s85
      %p89 = scmp.eq.s32.totalorder %s28, 0
      %p90 = por %p88, %p89
      %p91 = scmp.ne.s32.totalorder %s83, %s85
      %p92 = scmp.eq.s32.totalorder %s33, 1
      %p93 = por %p91, %p92
      %p94 = scmp.ne.s32.totalorder %s85, %s86
      %p95 = scmp.eq.s32.totalorder %s33, 0
      %p96 = por %p94, %p95
      %p97 = scmp.ne.s32.totalorder %s85, %s86
      %p98 = scmp.eq.s32.totalorder %s34, 1
      %p99 = por %p97, %p98
      %p101 = scmp.ne.s32.totalorder %s86, %s100
      %p102 = scmp.eq.s32.totalorder %s34, 0
      %p103 = por %p101, %p102
      %s105 = sadd.s32 %s104, 1
      %p108 = scmp.eq.s32.totalorder %s28, 1
      %p109 = scmp.ne.s32.totalorder %s104, %s106
      %p110 = scmp.eq.s32.totalorder %s28, 0
      %p111 = por %p109, %p110
      %p112 = scmp.ne.s32.totalorder %s104, %s106
      %p113 = scmp.eq.s32.totalorder %s33, 1
      %p114 = por %p112, %p113
      %p115 = scmp.ne.s32.totalorder %s106, %s107
      %p116 = scmp.eq.s32.totalorder %s33, 0
      %p117 = por %p115, %p116
      %p118 = scmp.ne.s32.totalorder %s106, %s107
      %p119 = scmp.eq.s32.totalorder %s34, 1
      %p120 = por %p118, %p119
      %p122 = scmp.ne.s32.totalorder %s107, %s121
      %p123 = scmp.eq.s32.totalorder %s34, 0
      %p124 = por %p122, %p123
      %s126 = sadd.s32 %s125, 1
      %p129 = scmp.eq.s32.totalorder %s28, 1
      %p130 = scmp.ne.s32.totalorder %s125, %s127
      %p131 = scmp.eq.s32.totalorder %s28, 0
      %p132 = por %p130, %p131
      %p133 = scmp.ne.s32.totalorder %s125, %s127
      %p134 = scmp.eq.s32.totalorder %s33, 1
      %p135 = por %p133, %p134
      %p136 = scmp.ne.s32.totalorder %s127, %s128
      %p137 = scmp.eq.s32.totalorder %s33, 0
      %p138 = por %p136, %p137
      %p139 = scmp.ne.s32.totalorder %s127, %s128
      %p140 = scmp.eq.s32.totalorder %s34, 1
      %p141 = por %p139, %p140
      %p143 = scmp.ne.s32.totalorder %s128, %s142
      %p144 = scmp.eq.s32.totalorder %s34, 0
      %p145 = por %p143, %p144
      %s147 = sadd.s32 %s146, 1
      %p150 = scmp.eq.s32.totalorder %s28, 1
      %p151 = scmp.ne.s32.totalorder %s146, %s148
      %p152 = scmp.eq.s32.totalorder %s28, 0
      %p153 = por %p151, %p152
      %p154 = scmp.ne.s32.totalorder %s146, %s148
      %p155 = scmp.eq.s32.totalorder %s33, 1
      %p156 = por %p154, %p155
      %p157 = scmp.ne.s32.totalorder %s148, %s149
      %p158 = scmp.eq.s32.totalorder %s33, 0
      %p159 = por %p157, %p158
      %p160 = scmp.ne.s32.totalorder %s148, %s149
      %p161 = scmp.eq.s32.totalorder %s34, 1
      %p162 = por %p160, %p161
      %p164 = scmp.ne.s32.totalorder %s149, %s163
      %p165 = scmp.eq.s32.totalorder %s34, 0
      %p166 = por %p164, %p165
      %s168 = sadd.s32 %s167, 1
      %p171 = scmp.eq.s32.totalorder %s28, 1
      %p172 = scmp.ne.s32.totalorder %s167, %s169
      %p173 = scmp.eq.s32.totalorder %s28, 0
      %p174 = por %p172, %p173
      %p175 = scmp.ne.s32.totalorder %s167, %s169
      %p176 = scmp.eq.s32.totalorder %s33, 1
      %p177 = por %p175, %p176
      %p178 = scmp.ne.s32.totalorder %s169, %s170
      %p179 = scmp.eq.s32.totalorder %s33, 0
      %p180 = por %p178, %p179
      %p181 = scmp.ne.s32.totalorder %s169, %s170
      %p182 = scmp.eq.s32.totalorder %s34, 1
      %p183 = por %p181, %p182
      %p185 = scmp.ne.s32.totalorder %s170, %s184
      %p186 = scmp.eq.s32.totalorder %s34, 0
      %p187 = por %p185, %p186
      %s189 = sadd.s32 %s188, 1
      %p192 = scmp.eq.s32.totalorder %s28, 1
      %p193 = scmp.ne.s32.totalorder %s188, %s190
      %p194 = scmp.eq.s32.totalorder %s28, 0
      %p195 = por %p193, %p194
      %p196 = scmp.ne.s32.totalorder %s188, %s190
      %p197 = scmp.eq.s32.totalorder %s33, 1
      %p198 = por %p196, %p197
      %p199 = scmp.ne.s32.totalorder %s190, %s191
      %p200 = scmp.eq.s32.totalorder %s33, 0
      %p201 = por %p199, %p200
      %p202 = scmp.ne.s32.totalorder %s190, %s191
      %p203 = scmp.eq.s32.totalorder %s34, 1
      %p204 = por %p202, %p203
      %p206 = scmp.ne.s32.totalorder %s191, %s205
      %p207 = scmp.eq.s32.totalorder %s34, 0
      %p208 = por %p206, %p207
      %s210 = sadd.s32 %s209, 1
      %p213 = scmp.eq.s32.totalorder %s28, 1
      %p214 = scmp.ne.s32.totalorder %s209, %s211
      %p215 = scmp.eq.s32.totalorder %s28, 0
      %p216 = por %p214, %p215
      %p217 = scmp.ne.s32.totalorder %s209, %s211
      %p218 = scmp.eq.s32.totalorder %s33, 1
      %p219 = por %p217, %p218
      %p220 = scmp.ne.s32.totalorder %s211, %s212
      %p221 = scmp.eq.s32.totalorder %s33, 0
      %p222 = por %p220, %p221
      %p223 = scmp.ne.s32.totalorder %s211, %s212
      %p224 = scmp.eq.s32.totalorder %s34, 1
      %p225 = por %p223, %p224
      %p227 = scmp.ne.s32.totalorder %s212, %s226
      %p228 = scmp.eq.s32.totalorder %s34, 0
      %p229 = por %p227, %p228
      %s231 = sadd.s32 %s230, 1
      %p234 = scmp.eq.s32.totalorder %s28, 1
      %p235 = scmp.ne.s32.totalorder %s230, %s232
      %p236 = scmp.eq.s32.totalorder %s28, 0
      %p237 = por %p235, %p236
      %p238 = scmp.ne.s32.totalorder %s230, %s232
      %p239 = scmp.eq.s32.totalorder %s33, 1
      %p240 = por %p238, %p239
      %p241 = scmp.ne.s32.totalorder %s232, %s233
      %p242 = scmp.eq.s32.totalorder %s33, 0
      %p243 = por %p241, %p242
      %p244 = scmp.ne.s32.totalorder %s232, %s233
      %p245 = scmp.eq.s32.totalorder %s34, 1
      %p246 = por %p244, %p245
      %p248 = scmp.ne.s32.totalorder %s233, %s247
      %p249 = scmp.eq.s32.totalorder %s34, 0
      %p250 = por %p248, %p249
      %s252 = sadd.s32 %s251, 1
      %p255 = scmp.eq.s32.totalorder %s28, 1
      %p256 = scmp.ne.s32.totalorder %s251, %s253
      %p257 = scmp.eq.s32.totalorder %s28, 0
      %p258 = por %p256, %p257
      %p259 = scmp.ne.s32.totalorder %s251, %s253
      %p260 = scmp.eq.s32.totalorder %s33, 1
      %p261 = por %p259, %p260
      %p262 = scmp.ne.s32.totalorder %s253, %s254
      %p263 = scmp.eq.s32.totalorder %s33, 0
      %p264 = por %p262, %p263
      %p265 = scmp.ne.s32.totalorder %s253, %s254
      %p266 = scmp.eq.s32.totalorder %s34, 1
      %p267 = por %p265, %p266
      %p269 = scmp.ne.s32.totalorder %s254, %s268
      %p270 = scmp.eq.s32.totalorder %s34, 0
      %p271 = por %p269, %p270
      %s273 = sadd.s32 %s272, 1
      %p276 = scmp.eq.s32.totalorder %s28, 1
      %p277 = scmp.ne.s32.totalorder %s272, %s274
      %p278 = scmp.eq.s32.totalorder %s28, 0
      %p279 = por %p277, %p278
      %p280 = scmp.ne.s32.totalorder %s272, %s274
      %p281 = scmp.eq.s32.totalorder %s33, 1
      %p282 = por %p280, %p281
      %p283 = scmp.ne.s32.totalorder %s274, %s275
      %p284 = scmp.eq.s32.totalorder %s33, 0
      %p285 = por %p283, %p284
      %p286 = scmp.ne.s32.totalorder %s274, %s275
      %p287 = scmp.eq.s32.totalorder %s34, 1
      %p288 = por %p286, %p287
      %p290 = scmp.ne.s32.totalorder %s275, %s289
      %p291 = scmp.eq.s32.totalorder %s34, 0
      %p292 = por %p290, %p291
      %s294 = sadd.s32 %s293, 1
      %p297 = scmp.eq.s32.totalorder %s28, 1
      %p298 = scmp.ne.s32.totalorder %s293, %s295
      %p299 = scmp.eq.s32.totalorder %s28, 0
      %p300 = por %p298, %p299
      %p301 = scmp.ne.s32.totalorder %s293, %s295
      %p302 = scmp.eq.s32.totalorder %s33, 1
      %p303 = por %p301, %p302
      %p304 = scmp.ne.s32.totalorder %s295, %s296
      %p305 = scmp.eq.s32.totalorder %s33, 0
      %p306 = por %p304, %p305
      %p307 = scmp.ne.s32.totalorder %s295, %s296
      %p308 = scmp.eq.s32.totalorder %s34, 1
      %p309 = por %p307, %p308
      %p311 = scmp.ne.s32.totalorder %s296, %s310
      %p312 = scmp.eq.s32.totalorder %s34, 0
      %p313 = por %p311, %p312
      %s314 = ssub.s32 %s28, %s35
      %p315 = scmp.eq.s32.totalorder %s314, 0
      %s317 = sadd.s32 %s316, 1
      %s318 = scalar_select %p315, %s316, %s317
      %p321 = pneg %p315
      %p322 = scmp.eq.s32.totalorder %s28, 1
      %p323 = por %p321, %p322
      %p324 = scmp.ne.s32.totalorder %s316, %s319
      %p325 = scmp.eq.s32.totalorder %s28, 0
      %p326 = por %p324, %p325
      %p327 = scmp.ne.s32.totalorder %s316, %s319
      %p328 = scmp.eq.s32.totalorder %s33, 1
      %p329 = por %p327, %p328
      %p330 = scmp.ne.s32.totalorder %s319, %s320
      %p331 = scmp.eq.s32.totalorder %s33, 0
      %p332 = por %p330, %p331
      %p333 = scmp.ne.s32.totalorder %s319, %s320
      %p334 = scmp.eq.s32.totalorder %s34, 1
      %p335 = por %p333, %p334
      %p337 = scmp.ne.s32.totalorder %s320, %s336
      %p338 = scmp.eq.s32.totalorder %s34, 0
      %p339 = por %p337, %p338
      %p340 = scmp.le.s32.totalorder 1, %s28
      %p341 = scmp.lt.s32.totalorder %s28, 3
      %p342 = pnand %p340, %p341
      %p343 = pneg %p342
      // Predicated region
      $region9: #{tpu_custom_call.1} parent=5 // pred_check
        _
      $region10: #{tpu_custom_call.1} parent=5 // pred_check_branch
        %345 = sbr.rel (%p342) target = $region12
      $region11: #{tpu_custom_call.1} parent=5 // pred_region
        %s346 = ssub.s32 %s28, 1
        // Predicated region
        $region13: #{tpu_custom_call.1} parent=11 // pred_check
          %p347 = pneg %p75
        $region14: #{tpu_custom_call.1} parent=11 // pred_check_branch
          %349 = sbr.rel (%p347) target = $region16
        $region15: #{tpu_custom_call.1} parent=11 // pred_region
          %s351 = ssub.s32 2048, 2048
          %352 = vsyncadd [#allocation6], %s351
          %s353 = sshll.u32 [#allocation5], 4
          %s354 = int_to_ptr.vmem [resolvable:$true] %s353
          %359 = dma.hbm_to_vmem [thread:$0]  %s1, 2048, %s354, [#allocation6], 128, 128, 8
        $region16: #{tpu_custom_call.1} parent=11 // pred_fallthru
          _
        // Predicated region
        $region17: #{tpu_custom_call.1} parent=11 // pred_check
          %p360 = pneg %p96
        $region18: #{tpu_custom_call.1} parent=11 // pred_check_branch
          %362 = sbr.rel (%p360) target = $region20
        $region19: #{tpu_custom_call.1} parent=11 // pred_region
          %s364 = ssub.s32 1024, 1024
          %365 = vsyncadd [#allocation6], %s364
          %s366 = sshll.u32 [#allocation7], 4
          %s367 = int_to_ptr.vmem [resolvable:$true] %s366
          %372 = dma.hbm_to_vmem [thread:$0]  %s2, 1024, %s367, [#allocation6], 64, 64, 4
        $region20: #{tpu_custom_call.1} parent=11 // pred_fallthru
          _
        // Predicated region
        $region21: #{tpu_custom_call.1} parent=11 // pred_check
          %p373 = pneg %p117
        $region22: #{tpu_custom_call.1} parent=11 // pred_check_branch
          %375 = sbr.rel (%p373) target = $region24
        $region23: #{tpu_custom_call.1} parent=11 // pred_region
          _
        $region24: #{tpu_custom_call.1} parent=11 // pred_fallthru
          _
        // Predicated region
        $region25: #{tpu_custom_call.1} parent=11 // pred_check
          %p376 = pneg %p138
        $region26: #{tpu_custom_call.1} parent=11 // pred_check_branch
          %378 = sbr.rel (%p376) target = $region28
        $region27: #{tpu_custom_call.1} parent=11 // pred_region
          _
        $region28: #{tpu_custom_call.1} parent=11 // pred_fallthru
          _
        // Predicated region
        $region29: #{tpu_custom_call.1} parent=11 // pred_check
          %p379 = pneg %p159
        $region30: #{tpu_custom_call.1} parent=11 // pred_check_branch
          %381 = sbr.rel (%p379) target = $region32
        $region31: #{tpu_custom_call.1} parent=11 // pred_region
          %s383 = ssub.s32 2048, 2048
          %384 = vsyncadd [#allocation9], %s383
          %s385 = sshll.u32 [#allocation8], 4
          %s386 = int_to_ptr.vmem [resolvable:$true] %s385
          %391 = dma.hbm_to_vmem [thread:$0]  %s5, 2048, %s386, [#allocation9], 128, 128, 8
        $region32: #{tpu_custom_call.1} parent=11 // pred_fallthru
          _
        // Predicated region
        $region33: #{tpu_custom_call.1} parent=11 // pred_check
          %p392 = pneg %p180
        $region34: #{tpu_custom_call.1} parent=11 // pred_check_branch
          %394 = sbr.rel (%p392) target = $region36
        $region35: #{tpu_custom_call.1} parent=11 // pred_region
          %s396 = ssub.s32 1024, 1024
          %397 = vsyncadd [#allocation9], %s396
          %s398 = sshll.u32 [#allocation10], 4
          %s399 = int_to_ptr.vmem [resolvable:$true] %s398
          %404 = dma.hbm_to_vmem [thread:$0]  %s6, 1024, %s399, [#allocation9], 64, 64, 4
        $region36: #{tpu_custom_call.1} parent=11 // pred_fallthru
          _
        // Predicated region
        $region37: #{tpu_custom_call.1} parent=11 // pred_check
          %p405 = pneg %p201
        $region38: #{tpu_custom_call.1} parent=11 // pred_check_branch
          %407 = sbr.rel (%p405) target = $region40
        $region39: #{tpu_custom_call.1} parent=11 // pred_region
          _
        $region40: #{tpu_custom_call.1} parent=11 // pred_fallthru
          _
        // Predicated region
        $region41: #{tpu_custom_call.1} parent=11 // pred_check
          %p408 = pneg %p222
        $region42: #{tpu_custom_call.1} parent=11 // pred_check_branch
          %410 = sbr.rel (%p408) target = $region44
        $region43: #{tpu_custom_call.1} parent=11 // pred_region
          _
        $region44: #{tpu_custom_call.1} parent=11 // pred_fallthru
          _
        // Predicated region
        $region45: #{tpu_custom_call.1} parent=11 // pred_check
          %p411 = pneg %p243
        $region46: #{tpu_custom_call.1} parent=11 // pred_check_branch
          %413 = sbr.rel (%p411) target = $region48
        $region47: #{tpu_custom_call.1} parent=11 // pred_region
          %s415 = ssub.s32 2048, 2048
          %416 = vsyncadd [#allocation12], %s415
          %s417 = sshll.u32 [#allocation11], 4
          %s418 = int_to_ptr.vmem [resolvable:$true] %s417
          %423 = dma.hbm_to_vmem [thread:$0]  %s9, 2048, %s418, [#allocation12], 128, 128, 8
        $region48: #{tpu_custom_call.1} parent=11 // pred_fallthru
          _
        // Predicated region
        $region49: #{tpu_custom_call.1} parent=11 // pred_check
          %p424 = pneg %p264
        $region50: #{tpu_custom_call.1} parent=11 // pred_check_branch
          %426 = sbr.rel (%p424) target = $region52
        $region51: #{tpu_custom_call.1} parent=11 // pred_region
          %s428 = ssub.s32 1024, 1024
          %429 = vsyncadd [#allocation12], %s428
          %s430 = sshll.u32 [#allocation13], 4
          %s431 = int_to_ptr.vmem [resolvable:$true] %s430
          %436 = dma.hbm_to_vmem [thread:$0]  %s10, 1024, %s431, [#allocation12], 64, 64, 4
        $region52: #{tpu_custom_call.1} parent=11 // pred_fallthru
          _
        // Predicated region
        $region53: #{tpu_custom_call.1} parent=11 // pred_check
          %p437 = pneg %p285
        $region54: #{tpu_custom_call.1} parent=11 // pred_check_branch
          %439 = sbr.rel (%p437) target = $region56
        $region55: #{tpu_custom_call.1} parent=11 // pred_region
          _
        $region56: #{tpu_custom_call.1} parent=11 // pred_fallthru
          _
        // Predicated region
        $region57: #{tpu_custom_call.1} parent=11 // pred_check
          %p440 = pneg %p306
        $region58: #{tpu_custom_call.1} parent=11 // pred_check_branch
          %442 = sbr.rel (%p440) target = $region60
        $region59: #{tpu_custom_call.1} parent=11 // pred_region
          _
        $region60: #{tpu_custom_call.1} parent=11 // pred_fallthru
          _
      $region12: #{tpu_custom_call.1} parent=5 // pred_fallthru
        _
      %p443 = scmp.lt.s32.totalorder %s28, 2
      // Predicated region
      $region61: #{tpu_custom_call.1} parent=5 // pred_check
        %p444 = pneg %p443
      $region62: #{tpu_custom_call.1} parent=5 // pred_check_branch
        %446 = sbr.rel (%p444) target = $region64
      $region63: #{tpu_custom_call.1} parent=5 // pred_region
        // Predicated region
        $region65: #{tpu_custom_call.1} parent=63 // pred_check
          %p447 = pneg %p48
        $region66: #{tpu_custom_call.1} parent=63 // pred_check_branch
          %449 = sbr.rel (%p447) target = $region68
        $region67: #{tpu_custom_call.1} parent=63 // pred_region
          %s450 = sand.u32 %s38, 1
          %s451 = scalar_lea.sflag [#allocation3], %s450
          %s452 = sand.u32 %s38, 1
          %s453 = smul.addr %s452, 16
          %s454 = scalar_lea.vmem [#allocation2], %s453
          %s455 = smul.u32 2, %s28
          %s457 = ssub.s32 256, 256
          %458 = vsyncadd %s451, %s457
          %s459 = smul.addr %s455, 128
          %s460 = scalar_lea.hbm %s0, %s459
          %s461 = sshll.u32 %s454, 4
          %s462 = int_to_ptr.vmem [resolvable:$true] %s461
          %467 = dma.hbm_to_vmem [thread:$0]  %s460, 256, %s462, %s451, 128, 128, 8
        $region68: #{tpu_custom_call.1} parent=63 // pred_fallthru
          _
      $region64: #{tpu_custom_call.1} parent=5 // pred_fallthru
        _
      %p468 = scmp.le.s32.totalorder 1, %s28
      %p469 = scmp.lt.s32.totalorder %s28, 3
      %p470 = pnand %p468, %p469
      %p471 = pneg %p470
      // Predicated region
      $region69: #{tpu_custom_call.1} parent=5 // pred_check
        _
      $region70: #{tpu_custom_call.1} parent=5 // pred_check_branch
        %473 = sbr.rel (%p470) target = $region72
      $region71: #{tpu_custom_call.1} parent=5 // pred_region
        %s474 = ssub.s32 %s28, 1
        %s475 = sand.u32 %s41, 1
        %s476 = scalar_lea.sflag [#allocation3], %s475
        %s477 = sand.u32 %s41, 1
        %s478 = smul.addr %s477, 16
        %s479 = scalar_lea.vmem [#allocation2], %s478
        // Predicated region
        $region73: #{tpu_custom_call.1} parent=71 // pred_check
          %p480 = pneg %p54
        $region74: #{tpu_custom_call.1} parent=71 // pred_check_branch
          %482 = sbr.rel (%p480) target = $region76
        $region75: #{tpu_custom_call.1} parent=71 // pred_region
          %483 = dma.done %s476, 256
        $region76: #{tpu_custom_call.1} parent=71 // pred_fallthru
          _
        // Predicated region
        $region77: #{tpu_custom_call.1} parent=71 // pred_check
          %p484 = pneg %p75
        $region78: #{tpu_custom_call.1} parent=71 // pred_check_branch
          %486 = sbr.rel (%p484) target = $region80
        $region79: #{tpu_custom_call.1} parent=71 // pred_region
          %487 = dma.done [#allocation6], 2048
        $region80: #{tpu_custom_call.1} parent=71 // pred_fallthru
          _
        // Predicated region
        $region81: #{tpu_custom_call.1} parent=71 // pred_check
          %p488 = pneg %p96
        $region82: #{tpu_custom_call.1} parent=71 // pred_check_branch
          %490 = sbr.rel (%p488) target = $region84
        $region83: #{tpu_custom_call.1} parent=71 // pred_region
          %491 = dma.done [#allocation6], 1024
        $region84: #{tpu_custom_call.1} parent=71 // pred_fallthru
          _
        // Predicated region
        $region85: #{tpu_custom_call.1} parent=71 // pred_check
          %p492 = pneg %p159
        $region86: #{tpu_custom_call.1} parent=71 // pred_check_branch
          %494 = sbr.rel (%p492) target = $region88
        $region87: #{tpu_custom_call.1} parent=71 // pred_region
          %495 = dma.done [#allocation9], 2048
        $region88: #{tpu_custom_call.1} parent=71 // pred_fallthru
          _
        // Predicated region
        $region89: #{tpu_custom_call.1} parent=71 // pred_check
          %p496 = pneg %p180
        $region90: #{tpu_custom_call.1} parent=71 // pred_check_branch
          %498 = sbr.rel (%p496) target = $region92
        $region91: #{tpu_custom_call.1} parent=71 // pred_region
          %499 = dma.done [#allocation9], 1024
        $region92: #{tpu_custom_call.1} parent=71 // pred_fallthru
          _
        // Predicated region
        $region93: #{tpu_custom_call.1} parent=71 // pred_check
          %p500 = pneg %p243
        $region94: #{tpu_custom_call.1} parent=71 // pred_check_branch
          %502 = sbr.rel (%p500) target = $region96
        $region95: #{tpu_custom_call.1} parent=71 // pred_region
          %503 = dma.done [#allocation12], 2048
        $region96: #{tpu_custom_call.1} parent=71 // pred_fallthru
          _
        // Predicated region
        $region97: #{tpu_custom_call.1} parent=71 // pred_check
          %p504 = pneg %p264
        $region98: #{tpu_custom_call.1} parent=71 // pred_check_branch
          %506 = sbr.rel (%p504) target = $region100
        $region99: #{tpu_custom_call.1} parent=71 // pred_region
          %507 = dma.done [#allocation12], 1024
        $region100: #{tpu_custom_call.1} parent=71 // pred_fallthru
          _
        %s508 = sand.u32 %s41, 1
        %s509 = scalar_lea.sflag [#allocation3], %s508
        %s510 = sand.u32 %s41, 1
        %s511 = smul.addr %s510, 16
        %s512 = scalar_lea.vmem [#allocation2], %s511
        %p513 = pneg %p54
        %p514 = pneg %p51
        %p515 = pneg %p75
        %p516 = pneg %p72
        %p517 = pneg %p96
        %p518 = pneg %p93
        %p519 = pneg %p117
        %p520 = pneg %p114
        %p521 = pneg %p138
        %p522 = pneg %p135
        %p523 = pneg %p159
        %p524 = pneg %p156
        %p525 = pneg %p180
        %p526 = pneg %p177
        %p527 = pneg %p201
        %p528 = pneg %p198
        %p529 = pneg %p222
        %p530 = pneg %p219
        %p531 = pneg %p243
        %p532 = pneg %p240
        %p533 = pneg %p264
        %p534 = pneg %p261
        %p535 = pneg %p285
        %p536 = pneg %p282
        %p537 = pneg %p306
        %p538 = pneg %p303
        %p539 = pneg %p332
        %p540 = pneg %p329
        %s541 = sand.u32 %s319, 1
        %s542 = scalar_lea.sflag [#allocation4], %s541
        %s543 = sand.u32 %s319, 1
        %s544 = smul.addr %s543, 16
        %s545 = scalar_lea.vmem [#allocation14], %s544
        %s546 = smul.u32 2, %s33
        %s547 = smul.u32 2, %s33
        %v549 = vld [vmem:[%s479] sm:$0xff]
        %v550 = vld [vmem:[%s479 + $0x8] sm:$0xff]
        %v551 = vpack.c.bf16 %v550, %v549
        %v552 = vmul.f32 %v549, %v549
        %v553 = vmul.f32 %v550, %v550
        %v554 = vpack.c.bf16 %v553, %v552
        %v555 = vld [vmem:[#allocation5] sm:$0xff]
        %v556 = vld [vmem:[#allocation5 + $0x8] sm:$0xff]
        %v557 = vld [vmem:[#allocation5 + $0x10] sm:$0xff]
        %v558 = vld [vmem:[#allocation5 + $0x18] sm:$0xff]
        %v559 = vld [vmem:[#allocation5 + $0x20] sm:$0xff]
        %v560 = vld [vmem:[#allocation5 + $0x28] sm:$0xff]
        %v561 = vld [vmem:[#allocation5 + $0x30] sm:$0xff]
        %v562 = vld [vmem:[#allocation5 + $0x38] sm:$0xff]
        %v563 = vld [vmem:[#allocation5 + $0x40] sm:$0xff]
        %v564 = vld [vmem:[#allocation5 + $0x48] sm:$0xff]
        %v565 = vld [vmem:[#allocation5 + $0x50] sm:$0xff]
        %v566 = vld [vmem:[#allocation5 + $0x58] sm:$0xff]
        %v567 = vld [vmem:[#allocation5 + $0x60] sm:$0xff]
        %v568 = vld [vmem:[#allocation5 + $0x68] sm:$0xff]
        %v569 = vld [vmem:[#allocation5 + $0x70] sm:$0xff]
        %v570 = vld [vmem:[#allocation5 + $0x78] sm:$0xff]
        %v571 = vld [vmem:[%s3] sm:$0x3]
        %v573 = vlaneseq
        %v574 = vshrl.u32 %v573, 7
        %v575 = vsub.s32 0, %v574
        %v576 = vrot.slane %v571, %v575
        %v577 = vlaneseq
        %v578 = vshrl.u32 %v577, 7
        %v579 = vsub.s32 1, %v578
        %v580 = vrot.slane %v571, %v579
        %v599 = vunpack.c.l.b16 %v555
        %v600 = vunpack.c.h.b16 %v555
        %v601 = vunpack.c.l.b16 %v556
        %v602 = vunpack.c.h.b16 %v556
        %v603 = vunpack.c.l.b16 %v557
        %v604 = vunpack.c.h.b16 %v557
        %v605 = vunpack.c.l.b16 %v558
        %v606 = vunpack.c.h.b16 %v558
        %v607 = vunpack.c.l.b16 %v559
        %v608 = vunpack.c.h.b16 %v559
        %v609 = vunpack.c.l.b16 %v560
        %v610 = vunpack.c.h.b16 %v560
        %v611 = vunpack.c.l.b16 %v561
        %v612 = vunpack.c.h.b16 %v561
        %v613 = vunpack.c.l.b16 %v562
        %v614 = vunpack.c.h.b16 %v562
        %v615 = vunpack.c.l.b16 %v563
        %v616 = vunpack.c.h.b16 %v563
        %v617 = vunpack.c.l.b16 %v564
        %v618 = vunpack.c.h.b16 %v564
        %v619 = vunpack.c.l.b16 %v565
        %v620 = vunpack.c.h.b16 %v565
        %v621 = vunpack.c.l.b16 %v566
        %v622 = vunpack.c.h.b16 %v566
        %v623 = vunpack.c.l.b16 %v567
        %v624 = vunpack.c.h.b16 %v567
        %v625 = vunpack.c.l.b16 %v568
        %v626 = vunpack.c.h.b16 %v568
        %v627 = vunpack.c.l.b16 %v569
        %v628 = vunpack.c.h.b16 %v569
        %v629 = vunpack.c.l.b16 %v570
        %v630 = vunpack.c.h.b16 %v570
        %v631 = vpack.c.b16 %v601, %v599
        %v632 = vpack.c.b16 %v602, %v600
        %v633 = vpack.c.b16 %v605, %v603
        %v634 = vpack.c.b16 %v606, %v604
        %v635 = vpack.c.b16 %v609, %v607
        %v636 = vpack.c.b16 %v610, %v608
        %v637 = vpack.c.b16 %v613, %v611
        %v638 = vpack.c.b16 %v614, %v612
        %v639 = vpack.c.b16 %v617, %v615
        %v640 = vpack.c.b16 %v618, %v616
        %v641 = vpack.c.b16 %v621, %v619
        %v642 = vpack.c.b16 %v622, %v620
        %v643 = vpack.c.b16 %v625, %v623
        %v644 = vpack.c.b16 %v626, %v624
        %v645 = vpack.c.b16 %v629, %v627
        %v646 = vpack.c.b16 %v630, %v628
        %663 = vmatprep.subr.bf16.mxu0 %v632
        %664 = vmatpush1.bf16.msra.mxu0 %v631
        %665 = vmatprep.subr.bf16.mxu0 %v634
        %666 = vmatpush1.bf16.msra.mxu0 %v633
        %667 = vmatprep.subr.bf16.mxu0 %v636
        %668 = vmatpush1.bf16.msra.mxu0 %v635
        %669 = vmatprep.subr.bf16.mxu0 %v638
        %670 = vmatpush1.bf16.msra.mxu0 %v637
        %671 = vmatprep.subr.bf16.mxu0 %v640
        %672 = vmatpush1.bf16.msra.mxu0 %v639
        %673 = vmatprep.subr.bf16.mxu0 %v642
        %674 = vmatpush1.bf16.msra.mxu0 %v641
        %675 = vmatprep.subr.bf16.mxu0 %v644
        %676 = vmatpush1.bf16.msra.mxu0 %v643
        %677 = vmatprep.subr.bf16.mxu0 %v646
        %678 = vmatpush1.bf16.msra.mxu0 %v645
        %679 = vmatprep.subr.bf16.mxu0 0
        %680 = vmatpush1.bf16.msra.mxu0 0
        %681 = vmatprep.subr.bf16.mxu0 0
        %682 = vmatpush1.bf16.msra.mxu0 0
        %683 = vmatprep.subr.bf16.mxu0 0
        %684 = vmatpush1.bf16.msra.mxu0 0
        %685 = vmatprep.subr.bf16.mxu0 0
        %686 = vmatpush1.bf16.msra.mxu0 0
        %687 = vmatprep.subr.bf16.mxu0 0
        %688 = vmatpush1.bf16.msra.mxu0 0
        %689 = vmatprep.subr.bf16.mxu0 0
        %690 = vmatpush1.bf16.msra.mxu0 0
        %691 = vmatprep.subr.bf16.mxu0 0
        %692 = vmatpush1.bf16.msra.mxu0 0
        %693 = vmatprep.subr.bf16.mxu0 0
        %694 = vmatpush1.bf16.msra.mxu0 0
        %695 = vmatprep.mubr.bf16.mxu0 0
        %696 = vmatmul.mubr.bf16.gmra.mrb[0].mxu0 %v551
        %v697 = vpop.f32.mrb[0].mxu0
        %v698 = vadd.f32 %v576, %v697
        %v699 = vpop.f32.mrb[0].mxu0
        %v700 = vadd.f32 %v580, %v699
        %v701 = vpop.f32.mrb[0].mxu0
        %v702 = vadd.f32 %v576, %v701
        %v703 = vpop.f32.mrb[0].mxu0
        %v704 = vadd.f32 %v580, %v703
        %705 = vdwg.mxu0
        %v706 = vld [vmem:[#allocation7] sm:$0xf]
        %v707 = vld [vmem:[#allocation7 + $0x4] sm:$0xf]
        %v708 = vld [vmem:[#allocation7 + $0x8] sm:$0xf]
        %v709 = vld [vmem:[#allocation7 + $0xc] sm:$0xf]
        %v710 = vld [vmem:[#allocation7 + $0x10] sm:$0xf]
        %v711 = vld [vmem:[#allocation7 + $0x14] sm:$0xf]
        %v712 = vld [vmem:[#allocation7 + $0x18] sm:$0xf]
        %v713 = vld [vmem:[#allocation7 + $0x1c] sm:$0xf]
        %v714 = vld [vmem:[#allocation7 + $0x20] sm:$0xf]
        %v715 = vld [vmem:[#allocation7 + $0x24] sm:$0xf]
        %v716 = vld [vmem:[#allocation7 + $0x28] sm:$0xf]
        %v717 = vld [vmem:[#allocation7 + $0x2c] sm:$0xf]
        %v718 = vld [vmem:[#allocation7 + $0x30] sm:$0xf]
        %v719 = vld [vmem:[#allocation7 + $0x34] sm:$0xf]
        %v720 = vld [vmem:[#allocation7 + $0x38] sm:$0xf]
        %v721 = vld [vmem:[#allocation7 + $0x3c] sm:$0xf]
        %v722 = vld [vmem:[%s4] sm:$0x1]
        %v724 = vlaneseq
        %v725 = vshrl.u32 %v724, 7
        %v726 = vsub.s32 0, %v725
        %v727 = vrot.slane %v722, %v726
        %v745 = vunpack.c.l.b16 %v706
        %v746 = vunpack.c.l.b16 %v707
        %v747 = vunpack.c.l.b16 %v708
        %v748 = vunpack.c.l.b16 %v709
        %v749 = vunpack.c.l.b16 %v710
        %v750 = vunpack.c.l.b16 %v711
        %v751 = vunpack.c.l.b16 %v712
        %v752 = vunpack.c.l.b16 %v713
        %v753 = vunpack.c.l.b16 %v714
        %v754 = vunpack.c.l.b16 %v715
        %v755 = vunpack.c.l.b16 %v716
        %v756 = vunpack.c.l.b16 %v717
        %v757 = vunpack.c.l.b16 %v718
        %v758 = vunpack.c.l.b16 %v719
        %v759 = vunpack.c.l.b16 %v720
        %v760 = vunpack.c.l.b16 %v721
        %v761 = vpack.c.b16 %v746, %v745
        %v762 = vpack.c.b16 %v748, %v747
        %v763 = vpack.c.b16 %v750, %v749
        %v764 = vpack.c.b16 %v752, %v751
        %v765 = vpack.c.b16 %v754, %v753
        %v766 = vpack.c.b16 %v756, %v755
        %v767 = vpack.c.b16 %v758, %v757
        %v768 = vpack.c.b16 %v760, %v759
        %777 = vmatprep.subr.bf16.mxu0 0
        %778 = vmatpush1.bf16.msra.mxu0 %v761
        %779 = vmatprep.subr.bf16.mxu0 0
        %780 = vmatpush1.bf16.msra.mxu0 %v762
        %781 = vmatprep.subr.bf16.mxu0 0
        %782 = vmatpush1.bf16.msra.mxu0 %v763
        %783 = vmatprep.subr.bf16.mxu0 0
        %784 = vmatpush1.bf16.msra.mxu0 %v764
        %785 = vmatprep.subr.bf16.mxu0 0
        %786 = vmatpush1.bf16.msra.mxu0 %v765
        %787 = vmatprep.subr.bf16.mxu0 0
        %788 = vmatpush1.bf16.msra.mxu0 %v766
        %789 = vmatprep.subr.bf16.mxu0 0
        %790 = vmatpush1.bf16.msra.mxu0 %v767
        %791 = vmatprep.subr.bf16.mxu0 0
        %792 = vmatpush1.bf16.msra.mxu0 %v768
        %793 = vmatprep.subr.bf16.mxu0 0
        %794 = vmatpush1.bf16.msra.mxu0 0
        %795 = vmatprep.subr.bf16.mxu0 0
        %796 = vmatpush1.bf16.msra.mxu0 0
        %797 = vmatprep.subr.bf16.mxu0 0
        %798 = vmatpush1.bf16.msra.mxu0 0
        %799 = vmatprep.subr.bf16.mxu0 0
        %800 = vmatpush1.bf16.msra.mxu0 0
        %801 = vmatprep.subr.bf16.mxu0 0
        %802 = vmatpush1.bf16.msra.mxu0 0
        %803 = vmatprep.subr.bf16.mxu0 0
        %804 = vmatpush1.bf16.msra.mxu0 0
        %805 = vmatprep.subr.bf16.mxu0 0
        %806 = vmatpush1.bf16.msra.mxu0 0
        %807 = vmatprep.subr.bf16.mxu0 0
        %808 = vmatpush1.bf16.msra.mxu0 0
        %809 = vmatprep.mubr.bf16.mxu0 0
        %810 = vmatmul.mubr.bf16.gmra.mrb[0].mxu0 %v554
        %v811 = vpop.f32.mrb[0].mxu0
        %v812 = vadd.f32 %v727, %v811
        %v813 = vpop.f32.mrb[0].mxu0
        %v814 = vpop.f32.mrb[0].mxu0
        %v815 = vadd.f32 %v727, %v814
        %v816 = vpop.f32.mrb[0].mxu0
        %817 = vdwg.mxu0
        %v818 = vmul.f32 %v698, %v700
        %v819 = vmul.f32 %v702, %v704
        %v820 = vadd.f32 %v818, %v812
        %v821 = vadd.f32 %v819, %v815
        %v822 = vmul.f32 %v820, 30.0
        %v823 = vmul.f32 %v821, 30.0
        %v824 = vand.u32 2147483647, %v822
        %vm825 = vcmp.le.f32.partialorder %v824, 0.7853982
        %vm826 = vcmp.lt.s32.totalorder %v822, 0
        %v827 = vand.u32 %v822, 2139095040
        %v828 = vshrl.u32 %v827, 23
        %v829 = vsub.s32 %v828, 127
        %v830 = vand.u32 2147483647, %v822
        %v831 = vand.u32 %v830, 8388607
        %v832 = vor.u32 %v831, 8388608
        %v833 = vsub.s32 0, %v832
        %v834 = vadd.s32 %v829, 1
        %vm835 = vcmp.gt.s32.totalorder %v834, 0
        %v836 = vsel %vm835, %v834, 0
        %v837 = vshrl.u32 %v836, 5
        %v838 = vand.u32 %v836, 31
        %v839 = vsub.s32 32, %v838
        %v840 = vshrl.u32 683565275, %v839
        %v841 = vshll.u32 683565275, %v838
        %v842 = vshrl.u32 2475754826, %v839
        %v843 = vor.u32 %v841, %v842
        %v844 = vshll.u32 2475754826, %v838
        %v845 = vshrl.u32 2131351028, %v839
        %v846 = vor.u32 %v844, %v845
        %v847 = vshll.u32 2131351028, %v838
        %v848 = vshrl.u32 2102212464, %v839
        %v849 = vor.u32 %v847, %v848
        %v850 = vshll.u32 2102212464, %v838
        %v851 = vshrl.u32 920167782, %v839
        %v852 = vor.u32 %v850, %v851
        %v853 = vshll.u32 920167782, %v838
        %v854 = vshrl.u32 1326507024, %v839
        %v855 = vor.u32 %v853, %v854
        %vm856 = vcmp.lt.s32.totalorder %v837, 1
        %vm857 = vcmp.lt.s32.totalorder %v837, 2
        %vm858 = vcmp.lt.s32.totalorder %v837, 3
        %vm859 = vcmp.lt.s32.totalorder %v837, 4
        %v860 = vsel %vm856, %v840, %v843
        %v861 = vsel %vm859, %v849, 2102212464
        %v862 = vsel %vm858, %v846, %v861
        %v863 = vsel %vm857, %v860, %v862
        %v864 = vsel %vm856, %v843, %v846
        %v865 = vsel %vm859, %v852, 920167782
        %v866 = vsel %vm858, %v849, %v865
        %v867 = vsel %vm857, %v864, %v866
        %v868 = vsel %vm856, %v846, %v849
        %v869 = vsel %vm859, %v855, 1326507024
        %v870 = vsel %vm858, %v852, %v869
        %v871 = vsel %vm857, %v868, %v870
        %v872 = vshll.u32 %v832, 8
        %v873 = vmul.u32.u64.compose %v872, %v871
        %v874 = vextract.low.u32 %v873
        %v875 = vextract.high.u32 %v873
        %v876 = vmul.u32.u64.compose %v872, %v867
        %v877 = vextract.low.u32 %v876
        %v878 = vextract.high.u32 %v876
        %v879 = vmul.u32 %v872, %v863
        %v880 = vadd.s32 %v875, %v877
        %vm881 = vc.u32 %v875, %v877
        %v882 = vadd.s32 %v878, 1
        %v883 = vsel %vm881, %v882, %v878
        %v884 = vadd.s32 %v879, %v883
        %v885 = vadd.s32 %v884, 536870912
        %v886 = vshrl.u32 %v885, 30
        %v887 = vshll.u32 %v886, 30
        %v888 = vsub.s32 %v884, %v887
        %vm889 = vcmp.lt.s32.totalorder %v888, 0
        %v890 = vsub.s32 0, %v888
        %v891 = vsel %vm889, %v890, %v888
        %v892 = vclz %v891
        %v893 = vsub.s32 %v892, 2
        %vm894 = vcmp.gt.s32.totalorder 0, %v893
        %v895 = vsel %vm894, 0, %v893
        %v896 = vsub.s32 32, %v895
        %v897 = vshll.u32 %v888, %v895
        %v898 = vshrl.u32 %v880, %v896
        %v899 = vor.u32 %v897, %v898
        %v900 = vsub.s32 4294967266, %v895
        %v901 = vadd.s32 %v900, 127
        %v902 = vshll.u32 %v901, 23
        %v903 = vor.u32 4788187, %v902
        %v904 = vand.u32 2147483647, %v903
        %v906 = vcvt.s32.f32 %v899
        %v907 = vmul.f32 %v906, %v904
        %v908 = vxor.u32 %v907, 2147483648
        %v909 = vsel %vm826, %v908, %v907
        %v910 = vsub.s32 4, %v886
        %v911 = vsel %vm826, %v910, %v886
        %v912 = vsel %vm825, %v822, %v909
        %v913 = vsel %vm825, 0, %v911
        %v914 = vcosq.f32.pop %v912
        %v915 = vsinq.f32.pop %v912
        %vm916 = vweird.f32 %v822
        %v917 = vadd.s32 %v913, 3
        %v918 = vand.u32 %v917, 3
        %vm919 = vcmp.lt.s32.totalorder %v918, 2
        %vm920 = vcmp.eq.s32.totalorder %v918, 0
        %v921 = vxor.u32 %v915, 2147483648
        %v922 = vsel %vm920, %v914, %v921
        %vm923 = vcmp.eq.s32.totalorder %v918, 2
        %v924 = vxor.u32 %v914, 2147483648
        %v925 = vsel %vm923, %v924, %v915
        %v926 = vsel %vm919, %v922, %v925
        %v927 = vsel %vm916, nan, %v926
        %v928 = vand.u32 2147483647, %v823
        %vm929 = vcmp.le.f32.partialorder %v928, 0.7853982
        %vm930 = vcmp.lt.s32.totalorder %v823, 0
        %v931 = vand.u32 %v823, 2139095040
        %v932 = vshrl.u32 %v931, 23
        %v933 = vsub.s32 %v932, 127
        %v934 = vand.u32 2147483647, %v823
        %v935 = vand.u32 %v934, 8388607
        %v936 = vor.u32 %v935, 8388608
        %v937 = vsub.s32 0, %v936
        %v938 = vadd.s32 %v933, 1
        %vm939 = vcmp.gt.s32.totalorder %v938, 0
        %v940 = vsel %vm939, %v938, 0
        %v941 = vshrl.u32 %v940, 5
        %v942 = vand.u32 %v940, 31
        %v943 = vsub.s32 32, %v942
        %v944 = vshrl.u32 683565275, %v943
        %v945 = vshll.u32 683565275, %v942
        %v946 = vshrl.u32 2475754826, %v943
        %v947 = vor.u32 %v945, %v946
        %v948 = vshll.u32 2475754826, %v942
        %v949 = vshrl.u32 2131351028, %v943
        %v950 = vor.u32 %v948, %v949
        %v951 = vshll.u32 2131351028, %v942
        %v952 = vshrl.u32 2102212464, %v943
        %v953 = vor.u32 %v951, %v952
        %v954 = vshll.u32 2102212464, %v942
        %v955 = vshrl.u32 920167782, %v943
        %v956 = vor.u32 %v954, %v955
        %v957 = vshll.u32 920167782, %v942
        %v958 = vshrl.u32 1326507024, %v943
        %v959 = vor.u32 %v957, %v958
        %vm960 = vcmp.lt.s32.totalorder %v941, 1
        %vm961 = vcmp.lt.s32.totalorder %v941, 2
        %vm962 = vcmp.lt.s32.totalorder %v941, 3
        %vm963 = vcmp.lt.s32.totalorder %v941, 4
        %v964 = vsel %vm960, %v944, %v947
        %v965 = vsel %vm963, %v953, 2102212464
        %v966 = vsel %vm962, %v950, %v965
        %v967 = vsel %vm961, %v964, %v966
        %v968 = vsel %vm960, %v947, %v950
        %v969 = vsel %vm963, %v956, 920167782
        %v970 = vsel %vm962, %v953, %v969
        %v971 = vsel %vm961, %v968, %v970
        %v972 = vsel %vm960, %v950, %v953
        %v973 = vsel %vm963, %v959, 1326507024
        %v974 = vsel %vm962, %v956, %v973
        %v975 = vsel %vm961, %v972, %v974
        %v976 = vshll.u32 %v936, 8
        %v977 = vmul.u32.u64.compose %v976, %v975
        %v978 = vextract.low.u32 %v977
        %v979 = vextract.high.u32 %v977
        %v980 = vmul.u32.u64.compose %v976, %v971
        %v981 = vextract.low.u32 %v980
        %v982 = vextract.high.u32 %v980
        %v983 = vmul.u32 %v976, %v967
        %v984 = vadd.s32 %v979, %v981
        %vm985 = vc.u32 %v979, %v981
        %v986 = vadd.s32 %v982, 1
        %v987 = vsel %vm985, %v986, %v982
        %v988 = vadd.s32 %v983, %v987
        %v989 = vadd.s32 %v988, 536870912
        %v990 = vshrl.u32 %v989, 30
        %v991 = vshll.u32 %v990, 30
        %v992 = vsub.s32 %v988, %v991
        %vm993 = vcmp.lt.s32.totalorder %v992, 0
        %v994 = vsub.s32 0, %v992
        %v995 = vsel %vm993, %v994, %v992
        %v996 = vclz %v995
        %v997 = vsub.s32 %v996, 2
        %vm998 = vcmp.gt.s32.totalorder 0, %v997
        %v999 = vsel %vm998, 0, %v997
        %v1000 = vsub.s32 32, %v999
        %v1001 = vshll.u32 %v992, %v999
        %v1002 = vshrl.u32 %v984, %v1000
        %v1003 = vor.u32 %v1001, %v1002
        %v1004 = vsub.s32 4294967266, %v999
        %v1005 = vadd.s32 %v1004, 127
        %v1006 = vshll.u32 %v1005, 23
        %v1007 = vor.u32 4788187, %v1006
        %v1008 = vand.u32 2147483647, %v1007
        %v1010 = vcvt.s32.f32 %v1003
        %v1011 = vmul.f32 %v1010, %v1008
        %v1012 = vxor.u32 %v1011, 2147483648
        %v1013 = vsel %vm930, %v1012, %v1011
        %v1014 = vsub.s32 4, %v990
        %v1015 = vsel %vm930, %v1014, %v990
        %v1016 = vsel %vm929, %v823, %v1013
        %v1017 = vsel %vm929, 0, %v1015
        %v1018 = vcosq.f32.pop %v1016
        %v1019 = vsinq.f32.pop %v1016
        %vm1020 = vweird.f32 %v823
        %v1021 = vadd.s32 %v1017, 3
        %v1022 = vand.u32 %v1021, 3
        %vm1023 = vcmp.lt.s32.totalorder %v1022, 2
        %vm1024 = vcmp.eq.s32.totalorder %v1022, 0
        %v1025 = vxor.u32 %v1019, 2147483648
        %v1026 = vsel %vm1024, %v1018, %v1025
        %vm1027 = vcmp.eq.s32.totalorder %v1022, 2
        %v1028 = vxor.u32 %v1018, 2147483648
        %v1029 = vsel %vm1027, %v1028, %v1019
        %v1030 = vsel %vm1023, %v1026, %v1029
        %v1031 = vsel %vm1020, nan, %v1030
        %v1032 = vpack.c.bf16 %v1031, %v927
        %v1033 = vmul.f32 %v927, %v927
        %v1034 = vmul.f32 %v1031, %v1031
        %v1035 = vpack.c.bf16 %v1034, %v1033
        %v1036 = vld [vmem:[#allocation8] sm:$0xff]
        %v1037 = vld [vmem:[#allocation8 + $0x8] sm:$0xff]
        %v1038 = vld [vmem:[#allocation8 + $0x10] sm:$0xff]
        %v1039 = vld [vmem:[#allocation8 + $0x18] sm:$0xff]
        %v1040 = vld [vmem:[#allocation8 + $0x20] sm:$0xff]
        %v1041 = vld [vmem:[#allocation8 + $0x28] sm:$0xff]
        %v1042 = vld [vmem:[#allocation8 + $0x30] sm:$0xff]
        %v1043 = vld [vmem:[#allocation8 + $0x38] sm:$0xff]
        %v1044 = vld [vmem:[#allocation8 + $0x40] sm:$0xff]
        %v1045 = vld [vmem:[#allocation8 + $0x48] sm:$0xff]
        %v1046 = vld [vmem:[#allocation8 + $0x50] sm:$0xff]
        %v1047 = vld [vmem:[#allocation8 + $0x58] sm:$0xff]
        %v1048 = vld [vmem:[#allocation8 + $0x60] sm:$0xff]
        %v1049 = vld [vmem:[#allocation8 + $0x68] sm:$0xff]
        %v1050 = vld [vmem:[#allocation8 + $0x70] sm:$0xff]
        %v1051 = vld [vmem:[#allocation8 + $0x78] sm:$0xff]
        %v1052 = vld [vmem:[%s7] sm:$0x3]
        %v1054 = vlaneseq
        %v1055 = vshrl.u32 %v1054, 7
        %v1056 = vsub.s32 0, %v1055
        %v1057 = vrot.slane %v1052, %v1056
        %v1058 = vlaneseq
        %v1059 = vshrl.u32 %v1058, 7
        %v1060 = vsub.s32 1, %v1059
        %v1061 = vrot.slane %v1052, %v1060
        %v1080 = vunpack.c.l.b16 %v1036
        %v1081 = vunpack.c.h.b16 %v1036
        %v1082 = vunpack.c.l.b16 %v1037
        %v1083 = vunpack.c.h.b16 %v1037
        %v1084 = vunpack.c.l.b16 %v1038
        %v1085 = vunpack.c.h.b16 %v1038
        %v1086 = vunpack.c.l.b16 %v1039
        %v1087 = vunpack.c.h.b16 %v1039
        %v1088 = vunpack.c.l.b16 %v1040
        %v1089 = vunpack.c.h.b16 %v1040
        %v1090 = vunpack.c.l.b16 %v1041
        %v1091 = vunpack.c.h.b16 %v1041
        %v1092 = vunpack.c.l.b16 %v1042
        %v1093 = vunpack.c.h.b16 %v1042
        %v1094 = vunpack.c.l.b16 %v1043
        %v1095 = vunpack.c.h.b16 %v1043
        %v1096 = vunpack.c.l.b16 %v1044
        %v1097 = vunpack.c.h.b16 %v1044
        %v1098 = vunpack.c.l.b16 %v1045
        %v1099 = vunpack.c.h.b16 %v1045
        %v1100 = vunpack.c.l.b16 %v1046
        %v1101 = vunpack.c.h.b16 %v1046
        %v1102 = vunpack.c.l.b16 %v1047
        %v1103 = vunpack.c.h.b16 %v1047
        %v1104 = vunpack.c.l.b16 %v1048
        %v1105 = vunpack.c.h.b16 %v1048
        %v1106 = vunpack.c.l.b16 %v1049
        %v1107 = vunpack.c.h.b16 %v1049
        %v1108 = vunpack.c.l.b16 %v1050
        %v1109 = vunpack.c.h.b16 %v1050
        %v1110 = vunpack.c.l.b16 %v1051
        %v1111 = vunpack.c.h.b16 %v1051
        %v1112 = vpack.c.b16 %v1082, %v1080
        %v1113 = vpack.c.b16 %v1083, %v1081
        %v1114 = vpack.c.b16 %v1086, %v1084
        %v1115 = vpack.c.b16 %v1087, %v1085
        %v1116 = vpack.c.b16 %v1090, %v1088
        %v1117 = vpack.c.b16 %v1091, %v1089
        %v1118 = vpack.c.b16 %v1094, %v1092
        %v1119 = vpack.c.b16 %v1095, %v1093
        %v1120 = vpack.c.b16 %v1098, %v1096
        %v1121 = vpack.c.b16 %v1099, %v1097
        %v1122 = vpack.c.b16 %v1102, %v1100
        %v1123 = vpack.c.b16 %v1103, %v1101
        %v1124 = vpack.c.b16 %v1106, %v1104
        %v1125 = vpack.c.b16 %v1107, %v1105
        %v1126 = vpack.c.b16 %v1110, %v1108
        %v1127 = vpack.c.b16 %v1111, %v1109
        %1144 = vmatprep.subr.bf16.mxu0 %v1113
        %1145 = vmatpush1.bf16.msra.mxu0 %v1112
        %1146 = vmatprep.subr.bf16.mxu0 %v1115
        %1147 = vmatpush1.bf16.msra.mxu0 %v1114
        %1148 = vmatprep.subr.bf16.mxu0 %v1117
        %1149 = vmatpush1.bf16.msra.mxu0 %v1116
        %1150 = vmatprep.subr.bf16.mxu0 %v1119
        %1151 = vmatpush1.bf16.msra.mxu0 %v1118
        %1152 = vmatprep.subr.bf16.mxu0 %v1121
        %1153 = vmatpush1.bf16.msra.mxu0 %v1120
        %1154 = vmatprep.subr.bf16.mxu0 %v1123
        %1155 = vmatpush1.bf16.msra.mxu0 %v1122
        %1156 = vmatprep.subr.bf16.mxu0 %v1125
        %1157 = vmatpush1.bf16.msra.mxu0 %v1124
        %1158 = vmatprep.subr.bf16.mxu0 %v1127
        %1159 = vmatpush1.bf16.msra.mxu0 %v1126
        %1160 = vmatprep.subr.bf16.mxu0 0
        %1161 = vmatpush1.bf16.msra.mxu0 0
        %1162 = vmatprep.subr.bf16.mxu0 0
        %1163 = vmatpush1.bf16.msra.mxu0 0
        %1164 = vmatprep.subr.bf16.mxu0 0
        %1165 = vmatpush1.bf16.msra.mxu0 0
        %1166 = vmatprep.subr.bf16.mxu0 0
        %1167 = vmatpush1.bf16.msra.mxu0 0
        %1168 = vmatprep.subr.bf16.mxu0 0
        %1169 = vmatpush1.bf16.msra.mxu0 0
        %1170 = vmatprep.subr.bf16.mxu0 0
        %1171 = vmatpush1.bf16.msra.mxu0 0
        %1172 = vmatprep.subr.bf16.mxu0 0
        %1173 = vmatpush1.bf16.msra.mxu0 0
        %1174 = vmatprep.subr.bf16.mxu0 0
        %1175 = vmatpush1.bf16.msra.mxu0 0
        %1176 = vmatprep.mubr.bf16.mxu0 0
        %1177 = vmatmul.mubr.bf16.gmra.mrb[0].mxu0 %v1032
        %v1178 = vpop.f32.mrb[0].mxu0
        %v1179 = vadd.f32 %v1057, %v1178
        %v1180 = vpop.f32.mrb[0].mxu0
        %v1181 = vadd.f32 %v1061, %v1180
        %v1182 = vpop.f32.mrb[0].mxu0
        %v1183 = vadd.f32 %v1057, %v1182
        %v1184 = vpop.f32.mrb[0].mxu0
        %v1185 = vadd.f32 %v1061, %v1184
        %1186 = vdwg.mxu0
        %v1187 = vld [vmem:[#allocation10] sm:$0xf]
        %v1188 = vld [vmem:[#allocation10 + $0x4] sm:$0xf]
        %v1189 = vld [vmem:[#allocation10 + $0x8] sm:$0xf]
        %v1190 = vld [vmem:[#allocation10 + $0xc] sm:$0xf]
        %v1191 = vld [vmem:[#allocation10 + $0x10] sm:$0xf]
        %v1192 = vld [vmem:[#allocation10 + $0x14] sm:$0xf]
        %v1193 = vld [vmem:[#allocation10 + $0x18] sm:$0xf]
        %v1194 = vld [vmem:[#allocation10 + $0x1c] sm:$0xf]
        %v1195 = vld [vmem:[#allocation10 + $0x20] sm:$0xf]
        %v1196 = vld [vmem:[#allocation10 + $0x24] sm:$0xf]
        %v1197 = vld [vmem:[#allocation10 + $0x28] sm:$0xf]
        %v1198 = vld [vmem:[#allocation10 + $0x2c] sm:$0xf]
        %v1199 = vld [vmem:[#allocation10 + $0x30] sm:$0xf]
        %v1200 = vld [vmem:[#allocation10 + $0x34] sm:$0xf]
        %v1201 = vld [vmem:[#allocation10 + $0x38] sm:$0xf]
        %v1202 = vld [vmem:[#allocation10 + $0x3c] sm:$0xf]
        %v1203 = vld [vmem:[%s8] sm:$0x1]
        %v1205 = vlaneseq
        %v1206 = vshrl.u32 %v1205, 7
        %v1207 = vsub.s32 0, %v1206
        %v1208 = vrot.slane %v1203, %v1207
        %v1226 = vunpack.c.l.b16 %v1187
        %v1227 = vunpack.c.l.b16 %v1188
        %v1228 = vunpack.c.l.b16 %v1189
        %v1229 = vunpack.c.l.b16 %v1190
        %v1230 = vunpack.c.l.b16 %v1191
        %v1231 = vunpack.c.l.b16 %v1192
        %v1232 = vunpack.c.l.b16 %v1193
        %v1233 = vunpack.c.l.b16 %v1194
        %v1234 = vunpack.c.l.b16 %v1195
        %v1235 = vunpack.c.l.b16 %v1196
        %v1236 = vunpack.c.l.b16 %v1197
        %v1237 = vunpack.c.l.b16 %v1198
        %v1238 = vunpack.c.l.b16 %v1199
        %v1239 = vunpack.c.l.b16 %v1200
        %v1240 = vunpack.c.l.b16 %v1201
        %v1241 = vunpack.c.l.b16 %v1202
        %v1242 = vpack.c.b16 %v1227, %v1226
        %v1243 = vpack.c.b16 %v1229, %v1228
        %v1244 = vpack.c.b16 %v1231, %v1230
        %v1245 = vpack.c.b16 %v1233, %v1232
        %v1246 = vpack.c.b16 %v1235, %v1234
        %v1247 = vpack.c.b16 %v1237, %v1236
        %v1248 = vpack.c.b16 %v1239, %v1238
        %v1249 = vpack.c.b16 %v1241, %v1240
        %1258 = vmatprep.subr.bf16.mxu0 0
        %1259 = vmatpush1.bf16.msra.mxu0 %v1242
        %1260 = vmatprep.subr.bf16.mxu0 0
        %1261 = vmatpush1.bf16.msra.mxu0 %v1243
        %1262 = vmatprep.subr.bf16.mxu0 0
        %1263 = vmatpush1.bf16.msra.mxu0 %v1244
        %1264 = vmatprep.subr.bf16.mxu0 0
        %1265 = vmatpush1.bf16.msra.mxu0 %v1245
        %1266 = vmatprep.subr.bf16.mxu0 0
        %1267 = vmatpush1.bf16.msra.mxu0 %v1246
        %1268 = vmatprep.subr.bf16.mxu0 0
        %1269 = vmatpush1.bf16.msra.mxu0 %v1247
        %1270 = vmatprep.subr.bf16.mxu0 0
        %1271 = vmatpush1.bf16.msra.mxu0 %v1248
        %1272 = vmatprep.subr.bf16.mxu0 0
        %1273 = vmatpush1.bf16.msra.mxu0 %v1249
        %1274 = vmatprep.subr.bf16.mxu0 0
        %1275 = vmatpush1.bf16.msra.mxu0 0
        %1276 = vmatprep.subr.bf16.mxu0 0
        %1277 = vmatpush1.bf16.msra.mxu0 0
        %1278 = vmatprep.subr.bf16.mxu0 0
        %1279 = vmatpush1.bf16.msra.mxu0 0
        %1280 = vmatprep.subr.bf16.mxu0 0
        %1281 = vmatpush1.bf16.msra.mxu0 0
        %1282 = vmatprep.subr.bf16.mxu0 0
        %1283 = vmatpush1.bf16.msra.mxu0 0
        %1284 = vmatprep.subr.bf16.mxu0 0
        %1285 = vmatpush1.bf16.msra.mxu0 0
        %1286 = vmatprep.subr.bf16.mxu0 0
        %1287 = vmatpush1.bf16.msra.mxu0 0
        %1288 = vmatprep.subr.bf16.mxu0 0
        %1289 = vmatpush1.bf16.msra.mxu0 0
        %1290 = vmatprep.mubr.bf16.mxu0 0
        %1291 = vmatmul.mubr.bf16.gmra.mrb[0].mxu0 %v1035
        %v1292 = vpop.f32.mrb[0].mxu0
        %v1293 = vadd.f32 %v1208, %v1292
        %v1294 = vpop.f32.mrb[0].mxu0
        %v1295 = vpop.f32.mrb[0].mxu0
        %v1296 = vadd.f32 %v1208, %v1295
        %v1297 = vpop.f32.mrb[0].mxu0
        %1298 = vdwg.mxu0
        %v1299 = vmul.f32 %v1179, %v1181
        %v1300 = vmul.f32 %v1183, %v1185
        %v1301 = vadd.f32 %v1299, %v1293
        %v1302 = vadd.f32 %v1300, %v1296
        %v1303 = vmul.f32 %v1301, 30.0
        %v1304 = vmul.f32 %v1302, 30.0
        %v1305 = vand.u32 2147483647, %v1303
        %vm1306 = vcmp.le.f32.partialorder %v1305, 0.7853982
        %vm1307 = vcmp.lt.s32.totalorder %v1303, 0
        %v1308 = vand.u32 %v1303, 2139095040
        %v1309 = vshrl.u32 %v1308, 23
        %v1310 = vsub.s32 %v1309, 127
        %v1311 = vand.u32 2147483647, %v1303
        %v1312 = vand.u32 %v1311, 8388607
        %v1313 = vor.u32 %v1312, 8388608
        %v1314 = vsub.s32 0, %v1313
        %v1315 = vadd.s32 %v1310, 1
        %vm1316 = vcmp.gt.s32.totalorder %v1315, 0
        %v1317 = vsel %vm1316, %v1315, 0
        %v1318 = vshrl.u32 %v1317, 5
        %v1319 = vand.u32 %v1317, 31
        %v1320 = vsub.s32 32, %v1319
        %v1321 = vshrl.u32 683565275, %v1320
        %v1322 = vshll.u32 683565275, %v1319
        %v1323 = vshrl.u32 2475754826, %v1320
        %v1324 = vor.u32 %v1322, %v1323
        %v1325 = vshll.u32 2475754826, %v1319
        %v1326 = vshrl.u32 2131351028, %v1320
        %v1327 = vor.u32 %v1325, %v1326
        %v1328 = vshll.u32 2131351028, %v1319
        %v1329 = vshrl.u32 2102212464, %v1320
        %v1330 = vor.u32 %v1328, %v1329
        %v1331 = vshll.u32 2102212464, %v1319
        %v1332 = vshrl.u32 920167782, %v1320
        %v1333 = vor.u32 %v1331, %v1332
        %v1334 = vshll.u32 920167782, %v1319
        %v1335 = vshrl.u32 1326507024, %v1320
        %v1336 = vor.u32 %v1334, %v1335
        %vm1337 = vcmp.lt.s32.totalorder %v1318, 1
        %vm1338 = vcmp.lt.s32.totalorder %v1318, 2
        %vm1339 = vcmp.lt.s32.totalorder %v1318, 3
        %vm1340 = vcmp.lt.s32.totalorder %v1318, 4
        %v1341 = vsel %vm1337, %v1321, %v1324
        %v1342 = vsel %vm1340, %v1330, 2102212464
        %v1343 = vsel %vm1339, %v1327, %v1342
        %v1344 = vsel %vm1338, %v1341, %v1343
        %v1345 = vsel %vm1337, %v1324, %v1327
        %v1346 = vsel %vm1340, %v1333, 920167782
        %v1347 = vsel %vm1339, %v1330, %v1346
        %v1348 = vsel %vm1338, %v1345, %v1347
        %v1349 = vsel %vm1337, %v1327, %v1330
        %v1350 = vsel %vm1340, %v1336, 1326507024
        %v1351 = vsel %vm1339, %v1333, %v1350
        %v1352 = vsel %vm1338, %v1349, %v1351
        %v1353 = vshll.u32 %v1313, 8
        %v1354 = vmul.u32.u64.compose %v1353, %v1352
        %v1355 = vextract.low.u32 %v1354
        %v1356 = vextract.high.u32 %v1354
        %v1357 = vmul.u32.u64.compose %v1353, %v1348
        %v1358 = vextract.low.u32 %v1357
        %v1359 = vextract.high.u32 %v1357
        %v1360 = vmul.u32 %v1353, %v1344
        %v1361 = vadd.s32 %v1356, %v1358
        %vm1362 = vc.u32 %v1356, %v1358
        %v1363 = vadd.s32 %v1359, 1
        %v1364 = vsel %vm1362, %v1363, %v1359
        %v1365 = vadd.s32 %v1360, %v1364
        %v1366 = vadd.s32 %v1365, 536870912
        %v1367 = vshrl.u32 %v1366, 30
        %v1368 = vshll.u32 %v1367, 30
        %v1369 = vsub.s32 %v1365, %v1368
        %vm1370 = vcmp.lt.s32.totalorder %v1369, 0
        %v1371 = vsub.s32 0, %v1369
        %v1372 = vsel %vm1370, %v1371, %v1369
        %v1373 = vclz %v1372
        %v1374 = vsub.s32 %v1373, 2
        %vm1375 = vcmp.gt.s32.totalorder 0, %v1374
        %v1376 = vsel %vm1375, 0, %v1374
        %v1377 = vsub.s32 32, %v1376
        %v1378 = vshll.u32 %v1369, %v1376
        %v1379 = vshrl.u32 %v1361, %v1377
        %v1380 = vor.u32 %v1378, %v1379
        %v1381 = vsub.s32 4294967266, %v1376
        %v1382 = vadd.s32 %v1381, 127
        %v1383 = vshll.u32 %v1382, 23
        %v1384 = vor.u32 4788187, %v1383
        %v1385 = vand.u32 2147483647, %v1384
        %v1387 = vcvt.s32.f32 %v1380
        %v1388 = vmul.f32 %v1387, %v1385
        %v1389 = vxor.u32 %v1388, 2147483648
        %v1390 = vsel %vm1307, %v1389, %v1388
        %v1391 = vsub.s32 4, %v1367
        %v1392 = vsel %vm1307, %v1391, %v1367
        %v1393 = vsel %vm1306, %v1303, %v1390
        %v1394 = vsel %vm1306, 0, %v1392
        %v1395 = vcosq.f32.pop %v1393
        %v1396 = vsinq.f32.pop %v1393
        %vm1397 = vweird.f32 %v1303
        %v1398 = vadd.s32 %v1394, 3
        %v1399 = vand.u32 %v1398, 3
        %vm1400 = vcmp.lt.s32.totalorder %v1399, 2
        %vm1401 = vcmp.eq.s32.totalorder %v1399, 0
        %v1402 = vxor.u32 %v1396, 2147483648
        %v1403 = vsel %vm1401, %v1395, %v1402
        %vm1404 = vcmp.eq.s32.totalorder %v1399, 2
        %v1405 = vxor.u32 %v1395, 2147483648
        %v1406 = vsel %vm1404, %v1405, %v1396
        %v1407 = vsel %vm1400, %v1403, %v1406
        %v1408 = vsel %vm1397, nan, %v1407
        %v1409 = vand.u32 2147483647, %v1304
        %vm1410 = vcmp.le.f32.partialorder %v1409, 0.7853982
        %vm1411 = vcmp.lt.s32.totalorder %v1304, 0
        %v1412 = vand.u32 %v1304, 2139095040
        %v1413 = vshrl.u32 %v1412, 23
        %v1414 = vsub.s32 %v1413, 127
        %v1415 = vand.u32 2147483647, %v1304
        %v1416 = vand.u32 %v1415, 8388607
        %v1417 = vor.u32 %v1416, 8388608
        %v1418 = vsub.s32 0, %v1417
        %v1419 = vadd.s32 %v1414, 1
        %vm1420 = vcmp.gt.s32.totalorder %v1419, 0
        %v1421 = vsel %vm1420, %v1419, 0
        %v1422 = vshrl.u32 %v1421, 5
        %v1423 = vand.u32 %v1421, 31
        %v1424 = vsub.s32 32, %v1423
        %v1425 = vshrl.u32 683565275, %v1424
        %v1426 = vshll.u32 683565275, %v1423
        %v1427 = vshrl.u32 2475754826, %v1424
        %v1428 = vor.u32 %v1426, %v1427
        %v1429 = vshll.u32 2475754826, %v1423
        %v1430 = vshrl.u32 2131351028, %v1424
        %v1431 = vor.u32 %v1429, %v1430
        %v1432 = vshll.u32 2131351028, %v1423
        %v1433 = vshrl.u32 2102212464, %v1424
        %v1434 = vor.u32 %v1432, %v1433
        %v1435 = vshll.u32 2102212464, %v1423
        %v1436 = vshrl.u32 920167782, %v1424
        %v1437 = vor.u32 %v1435, %v1436
        %v1438 = vshll.u32 920167782, %v1423
        %v1439 = vshrl.u32 1326507024, %v1424
        %v1440 = vor.u32 %v1438, %v1439
        %vm1441 = vcmp.lt.s32.totalorder %v1422, 1
        %vm1442 = vcmp.lt.s32.totalorder %v1422, 2
        %vm1443 = vcmp.lt.s32.totalorder %v1422, 3
        %vm1444 = vcmp.lt.s32.totalorder %v1422, 4
        %v1445 = vsel %vm1441, %v1425, %v1428
        %v1446 = vsel %vm1444, %v1434, 2102212464
        %v1447 = vsel %vm1443, %v1431, %v1446
        %v1448 = vsel %vm1442, %v1445, %v1447
        %v1449 = vsel %vm1441, %v1428, %v1431
        %v1450 = vsel %vm1444, %v1437, 920167782
        %v1451 = vsel %vm1443, %v1434, %v1450
        %v1452 = vsel %vm1442, %v1449, %v1451
        %v1453 = vsel %vm1441, %v1431, %v1434
        %v1454 = vsel %vm1444, %v1440, 1326507024
        %v1455 = vsel %vm1443, %v1437, %v1454
        %v1456 = vsel %vm1442, %v1453, %v1455
        %v1457 = vshll.u32 %v1417, 8
        %v1458 = vmul.u32.u64.compose %v1457, %v1456
        %v1459 = vextract.low.u32 %v1458
        %v1460 = vextract.high.u32 %v1458
        %v1461 = vmul.u32.u64.compose %v1457, %v1452
        %v1462 = vextract.low.u32 %v1461
        %v1463 = vextract.high.u32 %v1461
        %v1464 = vmul.u32 %v1457, %v1448
        %v1465 = vadd.s32 %v1460, %v1462
        %vm1466 = vc.u32 %v1460, %v1462
        %v1467 = vadd.s32 %v1463, 1
        %v1468 = vsel %vm1466, %v1467, %v1463
        %v1469 = vadd.s32 %v1464, %v1468
        %v1470 = vadd.s32 %v1469, 536870912
        %v1471 = vshrl.u32 %v1470, 30
        %v1472 = vshll.u32 %v1471, 30
        %v1473 = vsub.s32 %v1469, %v1472
        %vm1474 = vcmp.lt.s32.totalorder %v1473, 0
        %v1475 = vsub.s32 0, %v1473
        %v1476 = vsel %vm1474, %v1475, %v1473
        %v1477 = vclz %v1476
        %v1478 = vsub.s32 %v1477, 2
        %vm1479 = vcmp.gt.s32.totalorder 0, %v1478
        %v1480 = vsel %vm1479, 0, %v1478
        %v1481 = vsub.s32 32, %v1480
        %v1482 = vshll.u32 %v1473, %v1480
        %v1483 = vshrl.u32 %v1465, %v1481
        %v1484 = vor.u32 %v1482, %v1483
        %v1485 = vsub.s32 4294967266, %v1480
        %v1486 = vadd.s32 %v1485, 127
        %v1487 = vshll.u32 %v1486, 23
        %v1488 = vor.u32 4788187, %v1487
        %v1489 = vand.u32 2147483647, %v1488
        %v1491 = vcvt.s32.f32 %v1484
        %v1492 = vmul.f32 %v1491, %v1489
        %v1493 = vxor.u32 %v1492, 2147483648
        %v1494 = vsel %vm1411, %v1493, %v1492
        %v1495 = vsub.s32 4, %v1471
        %v1496 = vsel %vm1411, %v1495, %v1471
        %v1497 = vsel %vm1410, %v1304, %v1494
        %v1498 = vsel %vm1410, 0, %v1496
        %v1499 = vcosq.f32.pop %v1497
        %v1500 = vsinq.f32.pop %v1497
        %vm1501 = vweird.f32 %v1304
        %v1502 = vadd.s32 %v1498, 3
        %v1503 = vand.u32 %v1502, 3
        %vm1504 = vcmp.lt.s32.totalorder %v1503, 2
        %vm1505 = vcmp.eq.s32.totalorder %v1503, 0
        %v1506 = vxor.u32 %v1500, 2147483648
        %v1507 = vsel %vm1505, %v1499, %v1506
        %vm1508 = vcmp.eq.s32.totalorder %v1503, 2
        %v1509 = vxor.u32 %v1499, 2147483648
        %v1510 = vsel %vm1508, %v1509, %v1500
        %v1511 = vsel %vm1504, %v1507, %v1510
        %v1512 = vsel %vm1501, nan, %v1511
        %v1513 = vpack.c.bf16 %v1512, %v1408
        %v1514 = vmul.f32 %v1408, %v1408
        %v1515 = vmul.f32 %v1512, %v1512
        %v1516 = vpack.c.bf16 %v1515, %v1514
        %v1517 = vld [vmem:[#allocation11] sm:$0xff]
        %v1518 = vld [vmem:[#allocation11 + $0x8] sm:$0xff]
        %v1519 = vld [vmem:[#allocation11 + $0x10] sm:$0xff]
        %v1520 = vld [vmem:[#allocation11 + $0x18] sm:$0xff]
        %v1521 = vld [vmem:[#allocation11 + $0x20] sm:$0xff]
        %v1522 = vld [vmem:[#allocation11 + $0x28] sm:$0xff]
        %v1523 = vld [vmem:[#allocation11 + $0x30] sm:$0xff]
        %v1524 = vld [vmem:[#allocation11 + $0x38] sm:$0xff]
        %v1525 = vld [vmem:[#allocation11 + $0x40] sm:$0xff]
        %v1526 = vld [vmem:[#allocation11 + $0x48] sm:$0xff]
        %v1527 = vld [vmem:[#allocation11 + $0x50] sm:$0xff]
        %v1528 = vld [vmem:[#allocation11 + $0x58] sm:$0xff]
        %v1529 = vld [vmem:[#allocation11 + $0x60] sm:$0xff]
        %v1530 = vld [vmem:[#allocation11 + $0x68] sm:$0xff]
        %v1531 = vld [vmem:[#allocation11 + $0x70] sm:$0xff]
        %v1532 = vld [vmem:[#allocation11 + $0x78] sm:$0xff]
        %v1533 = vld [vmem:[%s11] sm:$0x3]
        %v1535 = vlaneseq
        %v1536 = vshrl.u32 %v1535, 7
        %v1537 = vsub.s32 0, %v1536
        %v1538 = vrot.slane %v1533, %v1537
        %v1539 = vlaneseq
        %v1540 = vshrl.u32 %v1539, 7
        %v1541 = vsub.s32 1, %v1540
        %v1542 = vrot.slane %v1533, %v1541
        %v1561 = vunpack.c.l.b16 %v1517
        %v1562 = vunpack.c.h.b16 %v1517
        %v1563 = vunpack.c.l.b16 %v1518
        %v1564 = vunpack.c.h.b16 %v1518
        %v1565 = vunpack.c.l.b16 %v1519
        %v1566 = vunpack.c.h.b16 %v1519
        %v1567 = vunpack.c.l.b16 %v1520
        %v1568 = vunpack.c.h.b16 %v1520
        %v1569 = vunpack.c.l.b16 %v1521
        %v1570 = vunpack.c.h.b16 %v1521
        %v1571 = vunpack.c.l.b16 %v1522
        %v1572 = vunpack.c.h.b16 %v1522
        %v1573 = vunpack.c.l.b16 %v1523
        %v1574 = vunpack.c.h.b16 %v1523
        %v1575 = vunpack.c.l.b16 %v1524
        %v1576 = vunpack.c.h.b16 %v1524
        %v1577 = vunpack.c.l.b16 %v1525
        %v1578 = vunpack.c.h.b16 %v1525
        %v1579 = vunpack.c.l.b16 %v1526
        %v1580 = vunpack.c.h.b16 %v1526
        %v1581 = vunpack.c.l.b16 %v1527
        %v1582 = vunpack.c.h.b16 %v1527
        %v1583 = vunpack.c.l.b16 %v1528
        %v1584 = vunpack.c.h.b16 %v1528
        %v1585 = vunpack.c.l.b16 %v1529
        %v1586 = vunpack.c.h.b16 %v1529
        %v1587 = vunpack.c.l.b16 %v1530
        %v1588 = vunpack.c.h.b16 %v1530
        %v1589 = vunpack.c.l.b16 %v1531
        %v1590 = vunpack.c.h.b16 %v1531
        %v1591 = vunpack.c.l.b16 %v1532
        %v1592 = vunpack.c.h.b16 %v1532
        %v1593 = vpack.c.b16 %v1563, %v1561
        %v1594 = vpack.c.b16 %v1564, %v1562
        %v1595 = vpack.c.b16 %v1567, %v1565
        %v1596 = vpack.c.b16 %v1568, %v1566
        %v1597 = vpack.c.b16 %v1571, %v1569
        %v1598 = vpack.c.b16 %v1572, %v1570
        %v1599 = vpack.c.b16 %v1575, %v1573
        %v1600 = vpack.c.b16 %v1576, %v1574
        %v1601 = vpack.c.b16 %v1579, %v1577
        %v1602 = vpack.c.b16 %v1580, %v1578
        %v1603 = vpack.c.b16 %v1583, %v1581
        %v1604 = vpack.c.b16 %v1584, %v1582
        %v1605 = vpack.c.b16 %v1587, %v1585
        %v1606 = vpack.c.b16 %v1588, %v1586
        %v1607 = vpack.c.b16 %v1591, %v1589
        %v1608 = vpack.c.b16 %v1592, %v1590
        %1625 = vmatprep.subr.bf16.mxu0 %v1594
        %1626 = vmatpush1.bf16.msra.mxu0 %v1593
        %1627 = vmatprep.subr.bf16.mxu0 %v1596
        %1628 = vmatpush1.bf16.msra.mxu0 %v1595
        %1629 = vmatprep.subr.bf16.mxu0 %v1598
        %1630 = vmatpush1.bf16.msra.mxu0 %v1597
        %1631 = vmatprep.subr.bf16.mxu0 %v1600
        %1632 = vmatpush1.bf16.msra.mxu0 %v1599
        %1633 = vmatprep.subr.bf16.mxu0 %v1602
        %1634 = vmatpush1.bf16.msra.mxu0 %v1601
        %1635 = vmatprep.subr.bf16.mxu0 %v1604
        %1636 = vmatpush1.bf16.msra.mxu0 %v1603
        %1637 = vmatprep.subr.bf16.mxu0 %v1606
        %1638 = vmatpush1.bf16.msra.mxu0 %v1605
        %1639 = vmatprep.subr.bf16.mxu0 %v1608
        %1640 = vmatpush1.bf16.msra.mxu0 %v1607
        %1641 = vmatprep.subr.bf16.mxu0 0
        %1642 = vmatpush1.bf16.msra.mxu0 0
        %1643 = vmatprep.subr.bf16.mxu0 0
        %1644 = vmatpush1.bf16.msra.mxu0 0
        %1645 = vmatprep.subr.bf16.mxu0 0
        %1646 = vmatpush1.bf16.msra.mxu0 0
        %1647 = vmatprep.subr.bf16.mxu0 0
        %1648 = vmatpush1.bf16.msra.mxu0 0
        %1649 = vmatprep.subr.bf16.mxu0 0
        %1650 = vmatpush1.bf16.msra.mxu0 0
        %1651 = vmatprep.subr.bf16.mxu0 0
        %1652 = vmatpush1.bf16.msra.mxu0 0
        %1653 = vmatprep.subr.bf16.mxu0 0
        %1654 = vmatpush1.bf16.msra.mxu0 0
        %1655 = vmatprep.subr.bf16.mxu0 0
        %1656 = vmatpush1.bf16.msra.mxu0 0
        %1657 = vmatprep.mubr.bf16.mxu0 0
        %1658 = vmatmul.mubr.bf16.gmra.mrb[0].mxu0 %v1513
        %v1659 = vpop.f32.mrb[0].mxu0
        %v1660 = vadd.f32 %v1538, %v1659
        %v1661 = vpop.f32.mrb[0].mxu0
        %v1662 = vadd.f32 %v1542, %v1661
        %v1663 = vpop.f32.mrb[0].mxu0
        %v1664 = vadd.f32 %v1538, %v1663
        %v1665 = vpop.f32.mrb[0].mxu0
        %v1666 = vadd.f32 %v1542, %v1665
        %1667 = vdwg.mxu0
        %v1668 = vld [vmem:[#allocation13] sm:$0xf]
        %v1669 = vld [vmem:[#allocation13 + $0x4] sm:$0xf]
        %v1670 = vld [vmem:[#allocation13 + $0x8] sm:$0xf]
        %v1671 = vld [vmem:[#allocation13 + $0xc] sm:$0xf]
        %v1672 = vld [vmem:[#allocation13 + $0x10] sm:$0xf]
        %v1673 = vld [vmem:[#allocation13 + $0x14] sm:$0xf]
        %v1674 = vld [vmem:[#allocation13 + $0x18] sm:$0xf]
        %v1675 = vld [vmem:[#allocation13 + $0x1c] sm:$0xf]
        %v1676 = vld [vmem:[#allocation13 + $0x20] sm:$0xf]
        %v1677 = vld [vmem:[#allocation13 + $0x24] sm:$0xf]
        %v1678 = vld [vmem:[#allocation13 + $0x28] sm:$0xf]
        %v1679 = vld [vmem:[#allocation13 + $0x2c] sm:$0xf]
        %v1680 = vld [vmem:[#allocation13 + $0x30] sm:$0xf]
        %v1681 = vld [vmem:[#allocation13 + $0x34] sm:$0xf]
        %v1682 = vld [vmem:[#allocation13 + $0x38] sm:$0xf]
        %v1683 = vld [vmem:[#allocation13 + $0x3c] sm:$0xf]
        %v1684 = vld [vmem:[%s12] sm:$0x1]
        %v1686 = vlaneseq
        %v1687 = vshrl.u32 %v1686, 7
        %v1688 = vsub.s32 0, %v1687
        %v1689 = vrot.slane %v1684, %v1688
        %v1707 = vunpack.c.l.b16 %v1668
        %v1708 = vunpack.c.l.b16 %v1669
        %v1709 = vunpack.c.l.b16 %v1670
        %v1710 = vunpack.c.l.b16 %v1671
        %v1711 = vunpack.c.l.b16 %v1672
        %v1712 = vunpack.c.l.b16 %v1673
        %v1713 = vunpack.c.l.b16 %v1674
        %v1714 = vunpack.c.l.b16 %v1675
        %v1715 = vunpack.c.l.b16 %v1676
        %v1716 = vunpack.c.l.b16 %v1677
        %v1717 = vunpack.c.l.b16 %v1678
        %v1718 = vunpack.c.l.b16 %v1679
        %v1719 = vunpack.c.l.b16 %v1680
        %v1720 = vunpack.c.l.b16 %v1681
        %v1721 = vunpack.c.l.b16 %v1682
        %v1722 = vunpack.c.l.b16 %v1683
        %v1723 = vpack.c.b16 %v1708, %v1707
        %v1724 = vpack.c.b16 %v1710, %v1709
        %v1725 = vpack.c.b16 %v1712, %v1711
        %v1726 = vpack.c.b16 %v1714, %v1713
        %v1727 = vpack.c.b16 %v1716, %v1715
        %v1728 = vpack.c.b16 %v1718, %v1717
        %v1729 = vpack.c.b16 %v1720, %v1719
        %v1730 = vpack.c.b16 %v1722, %v1721
        %1739 = vmatprep.subr.bf16.mxu0 0
        %1740 = vmatpush1.bf16.msra.mxu0 %v1723
        %1741 = vmatprep.subr.bf16.mxu0 0
        %1742 = vmatpush1.bf16.msra.mxu0 %v1724
        %1743 = vmatprep.subr.bf16.mxu0 0
        %1744 = vmatpush1.bf16.msra.mxu0 %v1725
        %1745 = vmatprep.subr.bf16.mxu0 0
        %1746 = vmatpush1.bf16.msra.mxu0 %v1726
        %1747 = vmatprep.subr.bf16.mxu0 0
        %1748 = vmatpush1.bf16.msra.mxu0 %v1727
        %1749 = vmatprep.subr.bf16.mxu0 0
        %1750 = vmatpush1.bf16.msra.mxu0 %v1728
        %1751 = vmatprep.subr.bf16.mxu0 0
        %1752 = vmatpush1.bf16.msra.mxu0 %v1729
        %1753 = vmatprep.subr.bf16.mxu0 0
        %1754 = vmatpush1.bf16.msra.mxu0 %v1730
        %1755 = vmatprep.subr.bf16.mxu0 0
        %1756 = vmatpush1.bf16.msra.mxu0 0
        %1757 = vmatprep.subr.bf16.mxu0 0
        %1758 = vmatpush1.bf16.msra.mxu0 0
        %1759 = vmatprep.subr.bf16.mxu0 0
        %1760 = vmatpush1.bf16.msra.mxu0 0
        %1761 = vmatprep.subr.bf16.mxu0 0
        %1762 = vmatpush1.bf16.msra.mxu0 0
        %1763 = vmatprep.subr.bf16.mxu0 0
        %1764 = vmatpush1.bf16.msra.mxu0 0
        %1765 = vmatprep.subr.bf16.mxu0 0
        %1766 = vmatpush1.bf16.msra.mxu0 0
        %1767 = vmatprep.subr.bf16.mxu0 0
        %1768 = vmatpush1.bf16.msra.mxu0 0
        %1769 = vmatprep.subr.bf16.mxu0 0
        %1770 = vmatpush1.bf16.msra.mxu0 0
        %1771 = vmatprep.mubr.bf16.mxu0 0
        %1772 = vmatmul.mubr.bf16.gmra.mrb[0].mxu0 %v1516
        %v1773 = vpop.f32.mrb[0].mxu0
        %v1774 = vadd.f32 %v1689, %v1773
        %v1775 = vpop.f32.mrb[0].mxu0
        %v1776 = vpop.f32.mrb[0].mxu0
        %v1777 = vadd.f32 %v1689, %v1776
        %v1778 = vpop.f32.mrb[0].mxu0
        %1779 = vdwg.mxu0
        %v1780 = vmul.f32 %v1660, %v1662
        %v1781 = vmul.f32 %v1664, %v1666
        %v1782 = vadd.f32 %v1780, %v1774
        %v1783 = vadd.f32 %v1781, %v1777
        %v1784 = vand.u32 2147483647, %v1782
        %v1785 = vand.u32 2147483647, %v1783
        %1786 = vst [vmem:[%s545] sm:$0xff] %v1784
        %1787 = vst [vmem:[%s545 + $0x8] sm:$0xff] %v1785
        %s1788 = sand.u32 %s319, 1
        %s1789 = scalar_lea.sflag [#allocation4], %s1788
        %s1790 = sand.u32 %s319, 1
        %s1791 = smul.addr %s1790, 16
        %s1792 = scalar_lea.vmem [#allocation14], %s1791
        // Predicated region
        $region101: #{tpu_custom_call.1} parent=71 // pred_check
          %p1793 = pneg %p329
        $region102: #{tpu_custom_call.1} parent=71 // pred_check_branch
          %1795 = sbr.rel (%p1793) target = $region104
        $region103: #{tpu_custom_call.1} parent=71 // pred_region
          %s1796 = smul.u32 2, %s33
          %s1798 = ssub.s32 256, 256
          %1799 = vsyncadd %s1789, %s1798
          %s1800 = smul.addr %s1796, 128
          %s1801 = scalar_lea.hbm %s13, %s1800
          %s1802 = sshll.u32 %s1792, 4
          %s1803 = int_to_ptr.vmem [resolvable:$true] %s1802
          %1808 = dma.vmem_to_hbm [thread:$0]  %s1803, 256, %s1801, %s1789, 128, 128, 8
        $region104: #{tpu_custom_call.1} parent=71 // pred_fallthru
          _
      $region72: #{tpu_custom_call.1} parent=5 // pred_fallthru
        _
      %p1809 = scmp.le.s32.totalorder 2, %s28
      // Predicated region
      $region105: #{tpu_custom_call.1} parent=5 // pred_check
        %p1810 = pneg %p1809
      $region106: #{tpu_custom_call.1} parent=5 // pred_check_branch
        %1812 = sbr.rel (%p1810) target = $region108
      $region107: #{tpu_custom_call.1} parent=5 // pred_region
        %s1813 = ssub.s32 %s28, 2
        // Predicated region
        $region109: #{tpu_custom_call.1} parent=107 // pred_check
          %p1814 = pneg %p335
        $region110: #{tpu_custom_call.1} parent=107 // pred_check_branch
          %1816 = sbr.rel (%p1814) target = $region112
        $region111: #{tpu_custom_call.1} parent=107 // pred_region
          %s1817 = sand.u32 %s320, 1
          %s1818 = scalar_lea.sflag [#allocation4], %s1817
          %s1819 = sand.u32 %s320, 1
          %s1820 = smul.addr %s1819, 16
          %s1821 = scalar_lea.vmem [#allocation14], %s1820
          %1822 = dma.done %s1818, 256
        $region112: #{tpu_custom_call.1} parent=107 // pred_fallthru
          _
      $region108: #{tpu_custom_call.1} parent=5 // pred_fallthru
        _
    $region6: #{tpu_custom_call.1} parent=1 // loop_footer
      %s32 = sadd.s32 1, %s28
    $region7: #{tpu_custom_call.1} parent=1 // loop_footer_branch
      %27 = sbr.rel target = $region3
    $region8: #{tpu_custom_call.1} parent=1 // loop_exit
      _
    %1823 = vsyncpa [#allocation3], 1
    %s1824 = scalar_lea.sflag [#allocation3], 1
    %1825 = vsyncpa %s1824, 1
    %1826 = vsyncpa [#allocation6], 1
    %1827 = vsyncpa [#allocation9], 1
    %1828 = vsyncpa [#allocation12], 1
    %1829 = vsyncpa [#allocation4], 1
    %s1830 = scalar_lea.sflag [#allocation4], 1
    %1831 = vsyncpa %s1830, 1

</llo_original>
